<compile_context>
chip_gen: v7x
topology: tpu7x:2x2x1
jax: 0.10.0
libtpu: 0.0.40
codegen_flags: <defaults>
</compile_context>

<pallas_src>
import functools

import jax
import jax.numpy as jnp
from jax import lax
from jax.experimental import pallas as pl
from jax.experimental.pallas import tpu as pltpu

EPS = 1e-5  # torch.nn.LayerNorm default eps

# Row layout of the packed (6, D) "vec" parameter slab.
_ROW_BO, _ROW_G1, _ROW_BE1, _ROW_B2, _ROW_G2, _ROW_BE2 = range(6)


def _single_buffer_kwargs():
    """Single-buffer constant-index weight blocks: their block index never changes across
    the grid, so the default 2-deep pipelining only doubles their VMEM footprint (matters
    most on v7x's 64 MiB VMEM).  Probed so the script still runs on jax versions without
    BlockSpec.pipeline_mode."""
    try:
        kw = dict(pipeline_mode=pl.Buffered(1))
        pl.BlockSpec((8, 128), lambda i: (0, 0), **kw)  # construction probe
        return kw
    except Exception:
        return {}


_CONST_SPEC_KW = _single_buffer_kwargs()


def _choose_block_b(batch):
    """Largest batch block that still leaves >= 2 grid blocks (v7x has 2 TensorCores)."""
    if batch < 2:
        return max(batch, 1)
    for bb in range(batch // 2, 0, -1):
        if batch % bb == 0:
            return bb
    return 1


def encoder_block_kernel(
    x_ref,        # (Bblk, S, D)  f32
    w_qkv_ref,    # (D, 3D)       bf16   columns: [Q heads | K heads | V heads], head-major
    wo_ref,       # (D, D)        bf16
    w1_ref,       # (D, Dff)      bf16
    w2_ref,       # (Dff, D)      bf16
    b_qkv_ref,    # (1, 3D)       f32
    b1_ref,       # (1, Dff)      f32
    vec_ref,      # (6, D)        f32    rows: [bo, g1, be1, b2, g2, be2]
    out_ref,      # (Bblk, S, D)  f32
    *,
    n_heads,
):
    D = w_qkv_ref.shape[0]
    H = n_heads
    F = D // H
    Bblk, S, _ = x_ref.shape
    M = Bblk * S

    vec = vec_ref[...]
    bo = vec[_ROW_BO:_ROW_BO + 1]
    g1, be1 = vec[_ROW_G1:_ROW_G1 + 1], vec[_ROW_BE1:_ROW_BE1 + 1]
    b2 = vec[_ROW_B2:_ROW_B2 + 1]
    g2, be2 = vec[_ROW_G2:_ROW_G2 + 1], vec[_ROW_BE2:_ROW_BE2 + 1]

    # Flatten the Bblk sequences into one (M, D) slab for every token-parallel matmul.
    x = x_ref[...].reshape(M, D)                   # f32, kept for the residuals
    xb = x.astype(jnp.bfloat16)

    # ---- Fused Q/K/V projection: one (M, D) @ (D, 3D) MXU matmul for all heads ----
    qkv = jnp.dot(xb, w_qkv_ref[...], preferred_element_type=jnp.float32) + b_qkv_ref[...]

    inv_sqrt_dk = 1.0 / jnp.sqrt(jnp.float32(F))
    # Hoist the 1/sqrt(d_k) scale into Q (M*D multiplies instead of per-score multiplies).
    q_all = (qkv[:, 0:D] * inv_sqrt_dk).astype(jnp.bfloat16)   # (M, D)
    k_all = qkv[:, D:2 * D].astype(jnp.bfloat16)               # (M, D)
    v_all = qkv[:, 2 * D:3 * D].astype(jnp.bfloat16)           # (M, D)

    # Defer softmax normalization past the PV matmul once S > F (S*F vs S*S multiplies).
    defer_norm = S > F

    # ---- Attention (per sequence so tokens never attend across sequences) ----
    # Static unroll: Bblk and H are tiny here.
    # TODO(synk): at larger H switch to lax.fori_loop(..., unroll=True); at realistic S
    # use flash-style KV tiling instead of materializing the (S, S) score tile, and on
    # v6e/v7x the exp/probability + LN scale/shift elementwise math could move to bf16
    # (kept f32 here because v5e's VPU/EUP have no bf16 path).
    per_seq = []
    for b in range(Bblk):
        r0, r1 = b * S, (b + 1) * S
        q_b, k_b, v_b = q_all[r0:r1], k_all[r0:r1], v_all[r0:r1]
        head_outs = []
        for h in range(H):
            lo, hi = h * F, (h + 1) * F
            s = jnp.einsum("qf,kf->qk", q_b[:, lo:hi], k_b[:, lo:hi],
                           preferred_element_type=jnp.float32)        # (S, S) f32
            # exp / sum == softmax; subtracting the row max is a mathematical no-op that
            # prevents overflow.  Denominator reciprocal runs on the EUP (free slot).
            s = s - jnp.max(s, axis=-1, keepdims=True)
            e = jnp.exp(s)
            inv_denom = pl.reciprocal(jnp.sum(e, axis=-1, keepdims=True), approx=True)
            if defer_norm:
                o_h = jnp.dot(e.astype(jnp.bfloat16), v_b[:, lo:hi],
                              preferred_element_type=jnp.float32) * inv_denom
            else:
                p = e * inv_denom
                o_h = jnp.dot(p.astype(jnp.bfloat16), v_b[:, lo:hi],
                              preferred_element_type=jnp.float32)      # (S, F)
            head_outs.append(o_h.astype(jnp.bfloat16))
        per_seq.append(jnp.concatenate(head_outs, axis=-1))            # (S, D) bf16
    att_cat = jnp.concatenate(per_seq, axis=0)                         # (M, D) bf16

    # ---- Output projection: re-concatenated heads -> single K=D matmul against Wo ----
    att = jnp.dot(att_cat, wo_ref[...], preferred_element_type=jnp.float32) + bo

    # ---- x1 = x + LayerNorm1(att)   (dropout = identity), f32 math ----
    mu1 = jnp.mean(att, axis=-1, keepdims=True)
    var1 = jnp.mean(jnp.square(att - mu1), axis=-1, keepdims=True)
    ln1 = (att - mu1) * lax.rsqrt(var1 + EPS) * g1 + be1
    x1 = x + ln1                                                       # (M, D)

    # ---- position-wise feed-forward (bf16 MXU operands, f32 accumulation) ----
    h1 = jnp.dot(x1.astype(jnp.bfloat16), w1_ref[...],
                 preferred_element_type=jnp.float32) + b1_ref[...]
    h1 = jnp.maximum(h1, 0.0)
    pos = jnp.dot(h1.astype(jnp.bfloat16), w2_ref[...],
                  preferred_element_type=jnp.float32) + b2

    # ---- out = x1 + LayerNorm2(pos)  (dropout = identity) ----
    mu2 = jnp.mean(pos, axis=-1, keepdims=True)
    var2 = jnp.mean(jnp.square(pos - mu2), axis=-1, keepdims=True)
    ln2 = (pos - mu2) * lax.rsqrt(var2 + EPS) * g2 + be2

    out_ref[...] = (x1 + ln2).reshape(Bblk, S, D)


def pack_params(p):
    """Pack the 16 PyTorch-style parameter tensors into 7 lane-dense slabs.
    Matmul weights are pre-cast to bf16 (halves DMA bytes / VMEM); biases & LN
    params stay f32."""
    H, D, F = p["wq"].shape

    def heads_to_slab(w):                       # (H, D, F) -> (D, H*F), head-major columns
        return jnp.transpose(w, (1, 0, 2)).reshape(D, H * F)

    w_qkv = jnp.concatenate(
        [heads_to_slab(p["wq"]), heads_to_slab(p["wk"]), heads_to_slab(p["wv"])],
        axis=1).astype(jnp.bfloat16)                                   # (D, 3D)
    b_qkv = jnp.concatenate(
        [p["bq"].reshape(1, H * F), p["bk"].reshape(1, H * F), p["bv"].reshape(1, H * F)],
        axis=1)                                                        # (1, 3D) f32
    vec = jnp.concatenate(
        [p["bo"], p["g1"], p["be1"], p["b2"], p["g2"], p["be2"]], axis=0)  # (6, D) f32

    return dict(
        w_qkv=w_qkv,
        wo=p["wo"].astype(jnp.bfloat16),
        w1=p["w1"].astype(jnp.bfloat16),
        w2=p["w2"].astype(jnp.bfloat16),
        b_qkv=b_qkv,
        b1=p["b1"],
        vec=vec,
    )


def encoder_block(x, params, *, block_b=None):
    """x: (B, S, d_model) float32. params: dict of PyTorch-style weights (see init_params)."""
    B, S, D = x.shape
    H = params["wq"].shape[0]
    kp = pack_params(params)

    if block_b is None:
        block_b = _choose_block_b(B)
    assert B % block_b == 0, "batch must be divisible by block_b"

    def const_spec(a):
        # Constant block index across the grid -> single-buffer (halves weight VMEM).
        return pl.BlockSpec(a.shape, lambda b: (0,) * a.ndim, **_CONST_SPEC_KW)

    # TODO(synk): for realistic sizes (d_model>=1024, d_ff>=4096, long S) the FFN
    # contraction needs a trailing "arbitrary" k grid axis with a pl.when-guarded
    # accumulator and the attention needs flash-style KV tiling, so w1/w2 and the (S,S)
    # score tile need not be fully VMEM-resident (mandatory on v7x's 64 MiB VMEM), with
    # vmem_limit_bytes re-derived per generation and bf16 output writeback considered.
    in_specs = [
        pl.BlockSpec((block_b, S, D), lambda b: (b, 0, 0)),   # x
        const_spec(kp["w_qkv"]), const_spec(kp["wo"]),
        const_spec(kp["w1"]), const_spec(kp["w2"]),
        const_spec(kp["b_qkv"]), const_spec(kp["b1"]), const_spec(kp["vec"]),
    ]

    return pl.pallas_call(
        functools.partial(encoder_block_kernel, n_heads=H),
        out_shape=jax.ShapeDtypeStruct((B, S, D), jnp.float32),
        grid_spec=pltpu.PrefetchScalarGridSpec(
            num_scalar_prefetch=0,
            grid=(B // block_b,),
            in_specs=in_specs,
            out_specs=pl.BlockSpec((block_b, S, D), lambda b: (b, 0, 0)),
        ),
        compiler_params=pltpu.CompilerParams(
            dimension_semantics=("parallel",),     # >= 2 blocks keep both v7x TCs busy
            vmem_limit_bytes=32 * 1024 * 1024,     # explicit; ample at these shapes
        ),
    )(x, kp["w_qkv"], kp["wo"], kp["w1"], kp["w2"], kp["b_qkv"], kp["b1"], kp["vec"])


def init_params(key, d_model, d_feature, n_heads, d_ff):
    """Deterministic synthetic parameters.  Linear weights stored already transposed to
    (in_features, out_features) so y = x @ W + b matches PyTorch's y = x @ W_t.T + b."""
    ks = jax.random.split(key, 16)
    s = 0.1
    return {
        "wq": jax.random.normal(ks[0], (n_heads, d_model, d_feature), jnp.float32) * s,
        "bq": jax.random.normal(ks[1], (n_heads, 1, d_feature), jnp.float32) * s,
        "wk": jax.random.normal(ks[2], (n_heads, d_model, d_feature), jnp.float32) * s,
        "bk": jax.random.normal(ks[3], (n_heads, 1, d_feature), jnp.float32) * s,
        "wv": jax.random.normal(ks[4], (n_heads, d_model, d_feature), jnp.float32) * s,
        "bv": jax.random.normal(ks[5], (n_heads, 1, d_feature), jnp.float32) * s,
        "wo": jax.random.normal(ks[6], (d_model, d_model), jnp.float32) * s,
        "bo": jax.random.normal(ks[7], (1, d_model), jnp.float32) * s,
        "w1": jax.random.normal(ks[8], (d_model, d_ff), jnp.float32) * s,
        "b1": jax.random.normal(ks[9], (1, d_ff), jnp.float32) * s,
        "w2": jax.random.normal(ks[10], (d_ff, d_model), jnp.float32) * s,
        "b2": jax.random.normal(ks[11], (1, d_model), jnp.float32) * s,
        "g1": 1.0 + 0.1 * jax.random.normal(ks[12], (1, d_model), jnp.float32),
        "be1": 0.1 * jax.random.normal(ks[13], (1, d_model), jnp.float32),
        "g2": 1.0 + 0.1 * jax.random.normal(ks[14], (1, d_model), jnp.float32),
        "be2": 0.1 * jax.random.normal(ks[15], (1, d_model), jnp.float32),
    }


def encoder_block_ref(x, p, mm_dtype=jnp.float32):
    """Pure-JAX reference mirroring the PyTorch forward (dropout = identity).
    mm_dtype=jnp.bfloat16 mirrors the kernel's MXU precision policy; jnp.float32 is the
    exact original math."""
    H, D, F = p["wq"].shape
    scale = 1.0 / jnp.sqrt(jnp.float32(F))

    def mm(a, b):
        return jnp.dot(a.astype(mm_dtype), b.astype(mm_dtype),
                       preferred_element_type=jnp.float32)

    def layer_norm(v, g, b):
        mu = jnp.mean(v, axis=-1, keepdims=True)
        var = jnp.mean((v - mu) ** 2, axis=-1, keepdims=True)
        return (v - mu) / jnp.sqrt(var + EPS) * g + b

    heads = []
    for h in range(H):
        q = mm(x, p["wq"][h]) + p["bq"][h]
        k = mm(x, p["wk"][h]) + p["bk"][h]
        v = mm(x, p["wv"][h]) + p["bv"][h]
        s = jnp.einsum("bsf,btf->bst", (q * scale).astype(mm_dtype), k.astype(mm_dtype),
                       preferred_element_type=jnp.float32)
        a = jnp.exp(s)
        a = a / jnp.sum(a, axis=-1, keepdims=True)
        heads.append(jnp.einsum("bst,btf->bsf", a.astype(mm_dtype), v.astype(mm_dtype),
                                preferred_element_type=jnp.float32))
    att = mm(jnp.concatenate(heads, axis=-1), p["wo"]) + p["bo"][0]
    x1 = x + layer_norm(att, p["g1"][0], p["be1"][0])
    h1 = jnp.maximum(mm(x1, p["w1"]) + p["b1"][0], 0.0)
    pos = mm(h1, p["w2"]) + p["b2"][0]
    return x1 + layer_norm(pos, p["g2"][0], p["be2"][0])


if __name__ == "__main__":
    # Small shapes consistent with the module (d_model = d_feature * n_heads).  B=4 lets
    # the wrapper pick block_b=2 -> grid=(2,): each grid step runs M=16-row matmuls and
    # both v7x TensorCores get a block; d_model=128 keeps everything lane-dense.
    B, S = 4, 8
    d_model, d_feature, n_heads, d_ff = 128, 32, 4, 256

    key = jax.random.PRNGKey(0)
    kx, kparam = jax.random.split(key)
    x = jax.random.normal(kx, (B, S, d_model), jnp.float32)
    params = init_params(kparam, d_model, d_feature, n_heads, d_ff)

    out = jax.block_until_ready(encoder_block(x, params))
    assert out.shape == (B, S, d_model)

    # Precision-matched reference (bf16 MXU operands, f32 accumulation): tight check.
    ref_bf16 = encoder_block_ref(x, params, mm_dtype=jnp.bfloat16)
    assert jnp.allclose(out, ref_bf16, atol=2e-2, rtol=1e-2), "mismatch vs bf16-matched reference"

    # Full-f32 reference (exact PyTorch math): loose sanity check (bf16 MXU rounding).
    ref_f32 = encoder_block_ref(x, params, mm_dtype=jnp.float32)
    assert jnp.allclose(out, ref_f32, atol=1e-1, rtol=1e-1), "mismatch vs f32 reference"

    print("KERNEL_OK")
</pallas_src>

<mosaic_0001>
module attributes {stable_mosaic.version = 11 : i64} {
  func.func @encoder_block_kernel(%arg0: i32, %arg1: memref<2x8x128xf32, #tpu.memory_space<vmem>>, %arg2: memref<128x384xbf16, #tpu.memory_space<vmem>>, %arg3: memref<128x128xbf16, #tpu.memory_space<vmem>>, %arg4: memref<128x256xbf16, #tpu.memory_space<vmem>>, %arg5: memref<256x128xbf16, #tpu.memory_space<vmem>>, %arg6: memref<1x384xf32, #tpu.memory_space<vmem>>, %arg7: memref<1x256xf32, #tpu.memory_space<vmem>>, %arg8: memref<6x128xf32, #tpu.memory_space<vmem>>, %arg9: memref<2x8x128xf32, #tpu.memory_space<vmem>>) attributes {dimension_semantics = [#tpu.dimension_semantics<parallel>], iteration_bounds = array<i64: 2>, scalar_prefetch = 0 : i64, scratch_operands = 0 : i64, tpu.core_type = #tpu.core_type<tc>, window_params = [{transform_indices = @transform_0, window_bounds = array<i64: 2, 8, 128>}, {pipeline_mode = #tpu.pipeline_mode<synchronous>, transform_indices = @transform_1, window_bounds = array<i64: 128, 384>}, {pipeline_mode = #tpu.pipeline_mode<synchronous>, transform_indices = @transform_2, window_bounds = array<i64: 128, 128>}, {pipeline_mode = #tpu.pipeline_mode<synchronous>, transform_indices = @transform_3, window_bounds = array<i64: 128, 256>}, {pipeline_mode = #tpu.pipeline_mode<synchronous>, transform_indices = @transform_4, window_bounds = array<i64: 256, 128>}, {pipeline_mode = #tpu.pipeline_mode<synchronous>, transform_indices = @transform_5, window_bounds = array<i64: 1, 384>}, {pipeline_mode = #tpu.pipeline_mode<synchronous>, transform_indices = @transform_6, window_bounds = array<i64: 1, 256>}, {pipeline_mode = #tpu.pipeline_mode<synchronous>, transform_indices = @transform_7, window_bounds = array<i64: 6, 128>}, {transform_indices = @transform_8, window_bounds = array<i64: 2, 8, 128>}]} {
    %c0 = arith.constant 0 : index
    %c0_0 = arith.constant 0 : index
    %0 = vector.load %arg8[%c0, %c0_0] : memref<6x128xf32, #tpu.memory_space<vmem>>, vector<6x128xf32>
    %1 = vector.extract_strided_slice %0 {offsets = [0, 0], sizes = [1, 128], strides = [1, 1]} : vector<6x128xf32> to vector<1x128xf32>
    %2 = vector.extract_strided_slice %0 {offsets = [1, 0], sizes = [1, 128], strides = [1, 1]} : vector<6x128xf32> to vector<1x128xf32>
    %3 = vector.extract_strided_slice %0 {offsets = [2, 0], sizes = [1, 128], strides = [1, 1]} : vector<6x128xf32> to vector<1x128xf32>
    %4 = vector.extract_strided_slice %0 {offsets = [3, 0], sizes = [1, 128], strides = [1, 1]} : vector<6x128xf32> to vector<1x128xf32>
    %5 = vector.extract_strided_slice %0 {offsets = [4, 0], sizes = [1, 128], strides = [1, 1]} : vector<6x128xf32> to vector<1x128xf32>
    %6 = vector.extract_strided_slice %0 {offsets = [5, 0], sizes = [1, 128], strides = [1, 1]} : vector<6x128xf32> to vector<1x128xf32>
    %c0_1 = arith.constant 0 : index
    %c0_2 = arith.constant 0 : index
    %c0_3 = arith.constant 0 : index
    %7 = vector.load %arg1[%c0_1, %c0_2, %c0_3] : memref<2x8x128xf32, #tpu.memory_space<vmem>>, vector<2x8x128xf32>
    %8 = vector.shape_cast %7 : vector<2x8x128xf32> to vector<16x128xf32>
    %9 = arith.truncf %8 : vector<16x128xf32> to vector<16x128xbf16>
    %c0_4 = arith.constant 0 : index
    %c0_5 = arith.constant 0 : index
    %10 = vector.load %arg2[%c0_4, %c0_5] : memref<128x384xbf16, #tpu.memory_space<vmem>>, vector<128x384xbf16>
    %cst = arith.constant dense<0.000000e+00> : vector<16x384xf32>
    %11 = tpu.matmul %9, %10, %cst {dimension_numbers = #tpu.dot_dimension_numbers<[1], [0], [0], [1], [0, 0, 1, 1], [], []>} : vector<16x128xbf16>, vector<128x384xbf16>, vector<16x384xf32> -> vector<16x384xf32>
    %c0_6 = arith.constant 0 : index
    %c0_7 = arith.constant 0 : index
    %12 = vector.load %arg6[%c0_6, %c0_7] : memref<1x384xf32, #tpu.memory_space<vmem>>, vector<1x384xf32>
    %13 = vector.broadcast %12 : vector<1x384xf32> to vector<16x384xf32>
    %14 = arith.addf %11, %13 : vector<16x384xf32>
    %cst_8 = arith.constant 3.200000e+01 : f32
    %15 = math.sqrt %cst_8 : f32
    %cst_9 = arith.constant 1.000000e+00 : f32
    %16 = arith.divf %cst_9, %15 : f32
    %17 = vector.extract_strided_slice %14 {offsets = [0, 0], sizes = [16, 128], strides = [1, 1]} : vector<16x384xf32> to vector<16x128xf32>
    %18 = vector.broadcast %16 : f32 to vector<16x128xf32>
    %19 = arith.mulf %17, %18 : vector<16x128xf32>
    %20 = arith.truncf %19 : vector<16x128xf32> to vector<16x128xbf16>
    %21 = vector.extract_strided_slice %14 {offsets = [0, 128], sizes = [16, 128], strides = [1, 1]} : vector<16x384xf32> to vector<16x128xf32>
    %22 = arith.truncf %21 : vector<16x128xf32> to vector<16x128xbf16>
    %23 = vector.extract_strided_slice %14 {offsets = [0, 256], sizes = [16, 128], strides = [1, 1]} : vector<16x384xf32> to vector<16x128xf32>
    %24 = arith.truncf %23 : vector<16x128xf32> to vector<16x128xbf16>
    %25 = vector.extract_strided_slice %20 {offsets = [0, 0], sizes = [8, 128], strides = [1, 1]} : vector<16x128xbf16> to vector<8x128xbf16>
    %26 = vector.extract_strided_slice %22 {offsets = [0, 0], sizes = [8, 128], strides = [1, 1]} : vector<16x128xbf16> to vector<8x128xbf16>
    %27 = vector.extract_strided_slice %24 {offsets = [0, 0], sizes = [8, 128], strides = [1, 1]} : vector<16x128xbf16> to vector<8x128xbf16>
    %28 = vector.extract_strided_slice %25 {offsets = [0, 0], sizes = [8, 32], strides = [1, 1]} : vector<8x128xbf16> to vector<8x32xbf16>
    %29 = vector.extract_strided_slice %26 {offsets = [0, 0], sizes = [8, 32], strides = [1, 1]} : vector<8x128xbf16> to vector<8x32xbf16>
    "tpu.trace_start"() <{level = 10 : i32, message = "qf,kf->qk"}> : () -> ()
    %cst_10 = arith.constant dense<0.000000e+00> : vector<8x8xf32>
    %30 = tpu.matmul %28, %29, %cst_10 {dimension_numbers = #tpu.dot_dimension_numbers<[1], [1], [0], [0], [0, 0, 1, 0], [], []>} : vector<8x32xbf16>, vector<8x32xbf16>, vector<8x8xf32> -> vector<8x8xf32>
    "tpu.trace_stop"() : () -> ()
    %cst_11 = arith.constant dense<0xFF800000> : vector<8xf32>
    %31 = vector.multi_reduction <maximumf>, %30, %cst_11 [1] : vector<8x8xf32> to vector<8xf32>
    %32 = vector.shape_cast %31 : vector<8xf32> to vector<8x1xf32>
    %33 = vector.broadcast %32 : vector<8x1xf32> to vector<8x8xf32>
    %34 = arith.subf %30, %33 : vector<8x8xf32>
    %35 = math.exp %34 : vector<8x8xf32>
    %cst_12 = arith.constant dense<0.000000e+00> : vector<8xf32>
    %36 = vector.multi_reduction <add>, %35, %cst_12 [1] : vector<8x8xf32> to vector<8xf32>
    %37 = vector.shape_cast %36 : vector<8xf32> to vector<8x1xf32>
    %38 = tpu.reciprocal %37 {approx = true} : vector<8x1xf32> -> vector<8x1xf32>
    %39 = vector.broadcast %38 : vector<8x1xf32> to vector<8x8xf32>
    %40 = arith.mulf %35, %39 : vector<8x8xf32>
    %41 = arith.truncf %40 : vector<8x8xf32> to vector<8x8xbf16>
    %42 = vector.extract_strided_slice %27 {offsets = [0, 0], sizes = [8, 32], strides = [1, 1]} : vector<8x128xbf16> to vector<8x32xbf16>
    %cst_13 = arith.constant dense<0.000000e+00> : vector<8x32xf32>
    %43 = tpu.matmul %41, %42, %cst_13 {dimension_numbers = #tpu.dot_dimension_numbers<[1], [0], [0], [1], [0, 0, 1, 1], [], []>} : vector<8x8xbf16>, vector<8x32xbf16>, vector<8x32xf32> -> vector<8x32xf32>
    %44 = arith.truncf %43 : vector<8x32xf32> to vector<8x32xbf16>
    %45 = vector.extract_strided_slice %25 {offsets = [0, 32], sizes = [8, 32], strides = [1, 1]} : vector<8x128xbf16> to vector<8x32xbf16>
    %46 = vector.extract_strided_slice %26 {offsets = [0, 32], sizes = [8, 32], strides = [1, 1]} : vector<8x128xbf16> to vector<8x32xbf16>
    "tpu.trace_start"() <{level = 10 : i32, message = "qf,kf->qk"}> : () -> ()
    %cst_14 = arith.constant dense<0.000000e+00> : vector<8x8xf32>
    %47 = tpu.matmul %45, %46, %cst_14 {dimension_numbers = #tpu.dot_dimension_numbers<[1], [1], [0], [0], [0, 0, 1, 0], [], []>} : vector<8x32xbf16>, vector<8x32xbf16>, vector<8x8xf32> -> vector<8x8xf32>
    "tpu.trace_stop"() : () -> ()
    %cst_15 = arith.constant dense<0xFF800000> : vector<8xf32>
    %48 = vector.multi_reduction <maximumf>, %47, %cst_15 [1] : vector<8x8xf32> to vector<8xf32>
    %49 = vector.shape_cast %48 : vector<8xf32> to vector<8x1xf32>
    %50 = vector.broadcast %49 : vector<8x1xf32> to vector<8x8xf32>
    %51 = arith.subf %47, %50 : vector<8x8xf32>
    %52 = math.exp %51 : vector<8x8xf32>
    %cst_16 = arith.constant dense<0.000000e+00> : vector<8xf32>
    %53 = vector.multi_reduction <add>, %52, %cst_16 [1] : vector<8x8xf32> to vector<8xf32>
    %54 = vector.shape_cast %53 : vector<8xf32> to vector<8x1xf32>
    %55 = tpu.reciprocal %54 {approx = true} : vector<8x1xf32> -> vector<8x1xf32>
    %56 = vector.broadcast %55 : vector<8x1xf32> to vector<8x8xf32>
    %57 = arith.mulf %52, %56 : vector<8x8xf32>
    %58 = arith.truncf %57 : vector<8x8xf32> to vector<8x8xbf16>
    %59 = vector.extract_strided_slice %27 {offsets = [0, 32], sizes = [8, 32], strides = [1, 1]} : vector<8x128xbf16> to vector<8x32xbf16>
    %cst_17 = arith.constant dense<0.000000e+00> : vector<8x32xf32>
    %60 = tpu.matmul %58, %59, %cst_17 {dimension_numbers = #tpu.dot_dimension_numbers<[1], [0], [0], [1], [0, 0, 1, 1], [], []>} : vector<8x8xbf16>, vector<8x32xbf16>, vector<8x32xf32> -> vector<8x32xf32>
    %61 = arith.truncf %60 : vector<8x32xf32> to vector<8x32xbf16>
    %62 = vector.extract_strided_slice %25 {offsets = [0, 64], sizes = [8, 32], strides = [1, 1]} : vector<8x128xbf16> to vector<8x32xbf16>
    %63 = vector.extract_strided_slice %26 {offsets = [0, 64], sizes = [8, 32], strides = [1, 1]} : vector<8x128xbf16> to vector<8x32xbf16>
    "tpu.trace_start"() <{level = 10 : i32, message = "qf,kf->qk"}> : () -> ()
    %cst_18 = arith.constant dense<0.000000e+00> : vector<8x8xf32>
    %64 = tpu.matmul %62, %63, %cst_18 {dimension_numbers = #tpu.dot_dimension_numbers<[1], [1], [0], [0], [0, 0, 1, 0], [], []>} : vector<8x32xbf16>, vector<8x32xbf16>, vector<8x8xf32> -> vector<8x8xf32>
    "tpu.trace_stop"() : () -> ()
    %cst_19 = arith.constant dense<0xFF800000> : vector<8xf32>
    %65 = vector.multi_reduction <maximumf>, %64, %cst_19 [1] : vector<8x8xf32> to vector<8xf32>
    %66 = vector.shape_cast %65 : vector<8xf32> to vector<8x1xf32>
    %67 = vector.broadcast %66 : vector<8x1xf32> to vector<8x8xf32>
    %68 = arith.subf %64, %67 : vector<8x8xf32>
    %69 = math.exp %68 : vector<8x8xf32>
    %cst_20 = arith.constant dense<0.000000e+00> : vector<8xf32>
    %70 = vector.multi_reduction <add>, %69, %cst_20 [1] : vector<8x8xf32> to vector<8xf32>
    %71 = vector.shape_cast %70 : vector<8xf32> to vector<8x1xf32>
    %72 = tpu.reciprocal %71 {approx = true} : vector<8x1xf32> -> vector<8x1xf32>
    %73 = vector.broadcast %72 : vector<8x1xf32> to vector<8x8xf32>
    %74 = arith.mulf %69, %73 : vector<8x8xf32>
    %75 = arith.truncf %74 : vector<8x8xf32> to vector<8x8xbf16>
    %76 = vector.extract_strided_slice %27 {offsets = [0, 64], sizes = [8, 32], strides = [1, 1]} : vector<8x128xbf16> to vector<8x32xbf16>
    %cst_21 = arith.constant dense<0.000000e+00> : vector<8x32xf32>
    %77 = tpu.matmul %75, %76, %cst_21 {dimension_numbers = #tpu.dot_dimension_numbers<[1], [0], [0], [1], [0, 0, 1, 1], [], []>} : vector<8x8xbf16>, vector<8x32xbf16>, vector<8x32xf32> -> vector<8x32xf32>
    %78 = arith.truncf %77 : vector<8x32xf32> to vector<8x32xbf16>
    %79 = vector.extract_strided_slice %25 {offsets = [0, 96], sizes = [8, 32], strides = [1, 1]} : vector<8x128xbf16> to vector<8x32xbf16>
    %80 = vector.extract_strided_slice %26 {offsets = [0, 96], sizes = [8, 32], strides = [1, 1]} : vector<8x128xbf16> to vector<8x32xbf16>
    "tpu.trace_start"() <{level = 10 : i32, message = "qf,kf->qk"}> : () -> ()
    %cst_22 = arith.constant dense<0.000000e+00> : vector<8x8xf32>
    %81 = tpu.matmul %79, %80, %cst_22 {dimension_numbers = #tpu.dot_dimension_numbers<[1], [1], [0], [0], [0, 0, 1, 0], [], []>} : vector<8x32xbf16>, vector<8x32xbf16>, vector<8x8xf32> -> vector<8x8xf32>
    "tpu.trace_stop"() : () -> ()
    %cst_23 = arith.constant dense<0xFF800000> : vector<8xf32>
    %82 = vector.multi_reduction <maximumf>, %81, %cst_23 [1] : vector<8x8xf32> to vector<8xf32>
    %83 = vector.shape_cast %82 : vector<8xf32> to vector<8x1xf32>
    %84 = vector.broadcast %83 : vector<8x1xf32> to vector<8x8xf32>
    %85 = arith.subf %81, %84 : vector<8x8xf32>
    %86 = math.exp %85 : vector<8x8xf32>
    %cst_24 = arith.constant dense<0.000000e+00> : vector<8xf32>
    %87 = vector.multi_reduction <add>, %86, %cst_24 [1] : vector<8x8xf32> to vector<8xf32>
    %88 = vector.shape_cast %87 : vector<8xf32> to vector<8x1xf32>
    %89 = tpu.reciprocal %88 {approx = true} : vector<8x1xf32> -> vector<8x1xf32>
    %90 = vector.broadcast %89 : vector<8x1xf32> to vector<8x8xf32>
    %91 = arith.mulf %86, %90 : vector<8x8xf32>
    %92 = arith.truncf %91 : vector<8x8xf32> to vector<8x8xbf16>
    %93 = vector.extract_strided_slice %27 {offsets = [0, 96], sizes = [8, 32], strides = [1, 1]} : vector<8x128xbf16> to vector<8x32xbf16>
    %cst_25 = arith.constant dense<0.000000e+00> : vector<8x32xf32>
    %94 = tpu.matmul %92, %93, %cst_25 {dimension_numbers = #tpu.dot_dimension_numbers<[1], [0], [0], [1], [0, 0, 1, 1], [], []>} : vector<8x8xbf16>, vector<8x32xbf16>, vector<8x32xf32> -> vector<8x32xf32>
    %95 = arith.truncf %94 : vector<8x32xf32> to vector<8x32xbf16>
    %96 = tpu.concatenate %44, %61, %78, %95 in 1 : vector<8x32xbf16>, vector<8x32xbf16>, vector<8x32xbf16>, vector<8x32xbf16> -> vector<8x128xbf16>
    %97 = vector.extract_strided_slice %20 {offsets = [8, 0], sizes = [8, 128], strides = [1, 1]} : vector<16x128xbf16> to vector<8x128xbf16>
    %98 = vector.extract_strided_slice %22 {offsets = [8, 0], sizes = [8, 128], strides = [1, 1]} : vector<16x128xbf16> to vector<8x128xbf16>
    %99 = vector.extract_strided_slice %24 {offsets = [8, 0], sizes = [8, 128], strides = [1, 1]} : vector<16x128xbf16> to vector<8x128xbf16>
    %100 = vector.extract_strided_slice %97 {offsets = [0, 0], sizes = [8, 32], strides = [1, 1]} : vector<8x128xbf16> to vector<8x32xbf16>
    %101 = vector.extract_strided_slice %98 {offsets = [0, 0], sizes = [8, 32], strides = [1, 1]} : vector<8x128xbf16> to vector<8x32xbf16>
    "tpu.trace_start"() <{level = 10 : i32, message = "qf,kf->qk"}> : () -> ()
    %cst_26 = arith.constant dense<0.000000e+00> : vector<8x8xf32>
    %102 = tpu.matmul %100, %101, %cst_26 {dimension_numbers = #tpu.dot_dimension_numbers<[1], [1], [0], [0], [0, 0, 1, 0], [], []>} : vector<8x32xbf16>, vector<8x32xbf16>, vector<8x8xf32> -> vector<8x8xf32>
    "tpu.trace_stop"() : () -> ()
    %cst_27 = arith.constant dense<0xFF800000> : vector<8xf32>
    %103 = vector.multi_reduction <maximumf>, %102, %cst_27 [1] : vector<8x8xf32> to vector<8xf32>
    %104 = vector.shape_cast %103 : vector<8xf32> to vector<8x1xf32>
    %105 = vector.broadcast %104 : vector<8x1xf32> to vector<8x8xf32>
    %106 = arith.subf %102, %105 : vector<8x8xf32>
    %107 = math.exp %106 : vector<8x8xf32>
    %cst_28 = arith.constant dense<0.000000e+00> : vector<8xf32>
    %108 = vector.multi_reduction <add>, %107, %cst_28 [1] : vector<8x8xf32> to vector<8xf32>
    %109 = vector.shape_cast %108 : vector<8xf32> to vector<8x1xf32>
    %110 = tpu.reciprocal %109 {approx = true} : vector<8x1xf32> -> vector<8x1xf32>
    %111 = vector.broadcast %110 : vector<8x1xf32> to vector<8x8xf32>
    %112 = arith.mulf %107, %111 : vector<8x8xf32>
    %113 = arith.truncf %112 : vector<8x8xf32> to vector<8x8xbf16>
    %114 = vector.extract_strided_slice %99 {offsets = [0, 0], sizes = [8, 32], strides = [1, 1]} : vector<8x128xbf16> to vector<8x32xbf16>
    %cst_29 = arith.constant dense<0.000000e+00> : vector<8x32xf32>
    %115 = tpu.matmul %113, %114, %cst_29 {dimension_numbers = #tpu.dot_dimension_numbers<[1], [0], [0], [1], [0, 0, 1, 1], [], []>} : vector<8x8xbf16>, vector<8x32xbf16>, vector<8x32xf32> -> vector<8x32xf32>
    %116 = arith.truncf %115 : vector<8x32xf32> to vector<8x32xbf16>
    %117 = vector.extract_strided_slice %97 {offsets = [0, 32], sizes = [8, 32], strides = [1, 1]} : vector<8x128xbf16> to vector<8x32xbf16>
    %118 = vector.extract_strided_slice %98 {offsets = [0, 32], sizes = [8, 32], strides = [1, 1]} : vector<8x128xbf16> to vector<8x32xbf16>
    "tpu.trace_start"() <{level = 10 : i32, message = "qf,kf->qk"}> : () -> ()
    %cst_30 = arith.constant dense<0.000000e+00> : vector<8x8xf32>
    %119 = tpu.matmul %117, %118, %cst_30 {dimension_numbers = #tpu.dot_dimension_numbers<[1], [1], [0], [0], [0, 0, 1, 0], [], []>} : vector<8x32xbf16>, vector<8x32xbf16>, vector<8x8xf32> -> vector<8x8xf32>
    "tpu.trace_stop"() : () -> ()
    %cst_31 = arith.constant dense<0xFF800000> : vector<8xf32>
    %120 = vector.multi_reduction <maximumf>, %119, %cst_31 [1] : vector<8x8xf32> to vector<8xf32>
    %121 = vector.shape_cast %120 : vector<8xf32> to vector<8x1xf32>
    %122 = vector.broadcast %121 : vector<8x1xf32> to vector<8x8xf32>
    %123 = arith.subf %119, %122 : vector<8x8xf32>
    %124 = math.exp %123 : vector<8x8xf32>
    %cst_32 = arith.constant dense<0.000000e+00> : vector<8xf32>
    %125 = vector.multi_reduction <add>, %124, %cst_32 [1] : vector<8x8xf32> to vector<8xf32>
    %126 = vector.shape_cast %125 : vector<8xf32> to vector<8x1xf32>
    %127 = tpu.reciprocal %126 {approx = true} : vector<8x1xf32> -> vector<8x1xf32>
    %128 = vector.broadcast %127 : vector<8x1xf32> to vector<8x8xf32>
    %129 = arith.mulf %124, %128 : vector<8x8xf32>
    %130 = arith.truncf %129 : vector<8x8xf32> to vector<8x8xbf16>
    %131 = vector.extract_strided_slice %99 {offsets = [0, 32], sizes = [8, 32], strides = [1, 1]} : vector<8x128xbf16> to vector<8x32xbf16>
    %cst_33 = arith.constant dense<0.000000e+00> : vector<8x32xf32>
    %132 = tpu.matmul %130, %131, %cst_33 {dimension_numbers = #tpu.dot_dimension_numbers<[1], [0], [0], [1], [0, 0, 1, 1], [], []>} : vector<8x8xbf16>, vector<8x32xbf16>, vector<8x32xf32> -> vector<8x32xf32>
    %133 = arith.truncf %132 : vector<8x32xf32> to vector<8x32xbf16>
    %134 = vector.extract_strided_slice %97 {offsets = [0, 64], sizes = [8, 32], strides = [1, 1]} : vector<8x128xbf16> to vector<8x32xbf16>
    %135 = vector.extract_strided_slice %98 {offsets = [0, 64], sizes = [8, 32], strides = [1, 1]} : vector<8x128xbf16> to vector<8x32xbf16>
    "tpu.trace_start"() <{level = 10 : i32, message = "qf,kf->qk"}> : () -> ()
    %cst_34 = arith.constant dense<0.000000e+00> : vector<8x8xf32>
    %136 = tpu.matmul %134, %135, %cst_34 {dimension_numbers = #tpu.dot_dimension_numbers<[1], [1], [0], [0], [0, 0, 1, 0], [], []>} : vector<8x32xbf16>, vector<8x32xbf16>, vector<8x8xf32> -> vector<8x8xf32>
    "tpu.trace_stop"() : () -> ()
    %cst_35 = arith.constant dense<0xFF800000> : vector<8xf32>
    %137 = vector.multi_reduction <maximumf>, %136, %cst_35 [1] : vector<8x8xf32> to vector<8xf32>
    %138 = vector.shape_cast %137 : vector<8xf32> to vector<8x1xf32>
    %139 = vector.broadcast %138 : vector<8x1xf32> to vector<8x8xf32>
    %140 = arith.subf %136, %139 : vector<8x8xf32>
    %141 = math.exp %140 : vector<8x8xf32>
    %cst_36 = arith.constant dense<0.000000e+00> : vector<8xf32>
    %142 = vector.multi_reduction <add>, %141, %cst_36 [1] : vector<8x8xf32> to vector<8xf32>
    %143 = vector.shape_cast %142 : vector<8xf32> to vector<8x1xf32>
    %144 = tpu.reciprocal %143 {approx = true} : vector<8x1xf32> -> vector<8x1xf32>
    %145 = vector.broadcast %144 : vector<8x1xf32> to vector<8x8xf32>
    %146 = arith.mulf %141, %145 : vector<8x8xf32>
    %147 = arith.truncf %146 : vector<8x8xf32> to vector<8x8xbf16>
    %148 = vector.extract_strided_slice %99 {offsets = [0, 64], sizes = [8, 32], strides = [1, 1]} : vector<8x128xbf16> to vector<8x32xbf16>
    %cst_37 = arith.constant dense<0.000000e+00> : vector<8x32xf32>
    %149 = tpu.matmul %147, %148, %cst_37 {dimension_numbers = #tpu.dot_dimension_numbers<[1], [0], [0], [1], [0, 0, 1, 1], [], []>} : vector<8x8xbf16>, vector<8x32xbf16>, vector<8x32xf32> -> vector<8x32xf32>
    %150 = arith.truncf %149 : vector<8x32xf32> to vector<8x32xbf16>
    %151 = vector.extract_strided_slice %97 {offsets = [0, 96], sizes = [8, 32], strides = [1, 1]} : vector<8x128xbf16> to vector<8x32xbf16>
    %152 = vector.extract_strided_slice %98 {offsets = [0, 96], sizes = [8, 32], strides = [1, 1]} : vector<8x128xbf16> to vector<8x32xbf16>
    "tpu.trace_start"() <{level = 10 : i32, message = "qf,kf->qk"}> : () -> ()
    %cst_38 = arith.constant dense<0.000000e+00> : vector<8x8xf32>
    %153 = tpu.matmul %151, %152, %cst_38 {dimension_numbers = #tpu.dot_dimension_numbers<[1], [1], [0], [0], [0, 0, 1, 0], [], []>} : vector<8x32xbf16>, vector<8x32xbf16>, vector<8x8xf32> -> vector<8x8xf32>
    "tpu.trace_stop"() : () -> ()
    %cst_39 = arith.constant dense<0xFF800000> : vector<8xf32>
    %154 = vector.multi_reduction <maximumf>, %153, %cst_39 [1] : vector<8x8xf32> to vector<8xf32>
    %155 = vector.shape_cast %154 : vector<8xf32> to vector<8x1xf32>
    %156 = vector.broadcast %155 : vector<8x1xf32> to vector<8x8xf32>
    %157 = arith.subf %153, %156 : vector<8x8xf32>
    %158 = math.exp %157 : vector<8x8xf32>
    %cst_40 = arith.constant dense<0.000000e+00> : vector<8xf32>
    %159 = vector.multi_reduction <add>, %158, %cst_40 [1] : vector<8x8xf32> to vector<8xf32>
    %160 = vector.shape_cast %159 : vector<8xf32> to vector<8x1xf32>
    %161 = tpu.reciprocal %160 {approx = true} : vector<8x1xf32> -> vector<8x1xf32>
    %162 = vector.broadcast %161 : vector<8x1xf32> to vector<8x8xf32>
    %163 = arith.mulf %158, %162 : vector<8x8xf32>
    %164 = arith.truncf %163 : vector<8x8xf32> to vector<8x8xbf16>
    %165 = vector.extract_strided_slice %99 {offsets = [0, 96], sizes = [8, 32], strides = [1, 1]} : vector<8x128xbf16> to vector<8x32xbf16>
    %cst_41 = arith.constant dense<0.000000e+00> : vector<8x32xf32>
    %166 = tpu.matmul %164, %165, %cst_41 {dimension_numbers = #tpu.dot_dimension_numbers<[1], [0], [0], [1], [0, 0, 1, 1], [], []>} : vector<8x8xbf16>, vector<8x32xbf16>, vector<8x32xf32> -> vector<8x32xf32>
    %167 = arith.truncf %166 : vector<8x32xf32> to vector<8x32xbf16>
    %168 = tpu.concatenate %116, %133, %150, %167 in 1 : vector<8x32xbf16>, vector<8x32xbf16>, vector<8x32xbf16>, vector<8x32xbf16> -> vector<8x128xbf16>
    %169 = tpu.concatenate %96, %168 in 0 : vector<8x128xbf16>, vector<8x128xbf16> -> vector<16x128xbf16>
    %c0_42 = arith.constant 0 : index
    %c0_43 = arith.constant 0 : index
    %170 = vector.load %arg3[%c0_42, %c0_43] : memref<128x128xbf16, #tpu.memory_space<vmem>>, vector<128x128xbf16>
    %cst_44 = arith.constant dense<0.000000e+00> : vector<16x128xf32>
    %171 = tpu.matmul %169, %170, %cst_44 {dimension_numbers = #tpu.dot_dimension_numbers<[1], [0], [0], [1], [0, 0, 1, 1], [], []>} : vector<16x128xbf16>, vector<128x128xbf16>, vector<16x128xf32> -> vector<16x128xf32>
    %172 = vector.broadcast %1 : vector<1x128xf32> to vector<16x128xf32>
    %173 = arith.addf %171, %172 : vector<16x128xf32>
    %cst_45 = arith.constant dense<0.000000e+00> : vector<16xf32>
    %174 = vector.multi_reduction <add>, %173, %cst_45 [1] : vector<16x128xf32> to vector<16xf32>
    %175 = vector.shape_cast %174 : vector<16xf32> to vector<16x1xf32>
    %cst_46 = arith.constant 1.280000e+02 : f32
    %176 = vector.broadcast %cst_46 : f32 to vector<16x1xf32>
    %177 = arith.divf %175, %176 : vector<16x1xf32>
    %178 = vector.broadcast %177 : vector<16x1xf32> to vector<16x128xf32>
    %179 = arith.subf %173, %178 : vector<16x128xf32>
    %180 = arith.mulf %179, %179 : vector<16x128xf32>
    %cst_47 = arith.constant dense<0.000000e+00> : vector<16xf32>
    %181 = vector.multi_reduction <add>, %180, %cst_47 [1] : vector<16x128xf32> to vector<16xf32>
    %182 = vector.shape_cast %181 : vector<16xf32> to vector<16x1xf32>
    %cst_48 = arith.constant 1.280000e+02 : f32
    %183 = vector.broadcast %cst_48 : f32 to vector<16x1xf32>
    %184 = arith.divf %182, %183 : vector<16x1xf32>
    %185 = vector.broadcast %177 : vector<16x1xf32> to vector<16x128xf32>
    %186 = arith.subf %173, %185 : vector<16x128xf32>
    %cst_49 = arith.constant 9.99999974E-6 : f32
    %187 = vector.broadcast %cst_49 : f32 to vector<16x1xf32>
    %188 = arith.addf %184, %187 : vector<16x1xf32>
    %189 = math.rsqrt %188 : vector<16x1xf32>
    %190 = vector.broadcast %189 : vector<16x1xf32> to vector<16x128xf32>
    %191 = arith.mulf %186, %190 : vector<16x128xf32>
    %192 = vector.broadcast %2 : vector<1x128xf32> to vector<16x128xf32>
    %193 = arith.mulf %191, %192 : vector<16x128xf32>
    %194 = vector.broadcast %3 : vector<1x128xf32> to vector<16x128xf32>
    %195 = arith.addf %193, %194 : vector<16x128xf32>
    %196 = arith.addf %8, %195 : vector<16x128xf32>
    %197 = arith.truncf %196 : vector<16x128xf32> to vector<16x128xbf16>
    %c0_50 = arith.constant 0 : index
    %c0_51 = arith.constant 0 : index
    %198 = vector.load %arg4[%c0_50, %c0_51] : memref<128x256xbf16, #tpu.memory_space<vmem>>, vector<128x256xbf16>
    %cst_52 = arith.constant dense<0.000000e+00> : vector<16x256xf32>
    %199 = tpu.matmul %197, %198, %cst_52 {dimension_numbers = #tpu.dot_dimension_numbers<[1], [0], [0], [1], [0, 0, 1, 1], [], []>} : vector<16x128xbf16>, vector<128x256xbf16>, vector<16x256xf32> -> vector<16x256xf32>
    %c0_53 = arith.constant 0 : index
    %c0_54 = arith.constant 0 : index
    %200 = vector.load %arg7[%c0_53, %c0_54] : memref<1x256xf32, #tpu.memory_space<vmem>>, vector<1x256xf32>
    %201 = vector.broadcast %200 : vector<1x256xf32> to vector<16x256xf32>
    %202 = arith.addf %199, %201 : vector<16x256xf32>
    %cst_55 = arith.constant 0.000000e+00 : f32
    %203 = vector.broadcast %cst_55 : f32 to vector<16x256xf32>
    %204 = arith.maximumf %202, %203 : vector<16x256xf32>
    %205 = arith.truncf %204 : vector<16x256xf32> to vector<16x256xbf16>
    %c0_56 = arith.constant 0 : index
    %c0_57 = arith.constant 0 : index
    %206 = vector.load %arg5[%c0_56, %c0_57] : memref<256x128xbf16, #tpu.memory_space<vmem>>, vector<256x128xbf16>
    %cst_58 = arith.constant dense<0.000000e+00> : vector<16x128xf32>
    %207 = tpu.matmul %205, %206, %cst_58 {dimension_numbers = #tpu.dot_dimension_numbers<[1], [0], [0], [1], [0, 0, 1, 1], [], []>} : vector<16x256xbf16>, vector<256x128xbf16>, vector<16x128xf32> -> vector<16x128xf32>
    %208 = vector.broadcast %4 : vector<1x128xf32> to vector<16x128xf32>
    %209 = arith.addf %207, %208 : vector<16x128xf32>
    %cst_59 = arith.constant dense<0.000000e+00> : vector<16xf32>
    %210 = vector.multi_reduction <add>, %209, %cst_59 [1] : vector<16x128xf32> to vector<16xf32>
    %211 = vector.shape_cast %210 : vector<16xf32> to vector<16x1xf32>
    %cst_60 = arith.constant 1.280000e+02 : f32
    %212 = vector.broadcast %cst_60 : f32 to vector<16x1xf32>
    %213 = arith.divf %211, %212 : vector<16x1xf32>
    %214 = vector.broadcast %213 : vector<16x1xf32> to vector<16x128xf32>
    %215 = arith.subf %209, %214 : vector<16x128xf32>
    %216 = arith.mulf %215, %215 : vector<16x128xf32>
    %cst_61 = arith.constant dense<0.000000e+00> : vector<16xf32>
    %217 = vector.multi_reduction <add>, %216, %cst_61 [1] : vector<16x128xf32> to vector<16xf32>
    %218 = vector.shape_cast %217 : vector<16xf32> to vector<16x1xf32>
    %cst_62 = arith.constant 1.280000e+02 : f32
    %219 = vector.broadcast %cst_62 : f32 to vector<16x1xf32>
    %220 = arith.divf %218, %219 : vector<16x1xf32>
    %221 = vector.broadcast %213 : vector<16x1xf32> to vector<16x128xf32>
    %222 = arith.subf %209, %221 : vector<16x128xf32>
    %cst_63 = arith.constant 9.99999974E-6 : f32
    %223 = vector.broadcast %cst_63 : f32 to vector<16x1xf32>
    %224 = arith.addf %220, %223 : vector<16x1xf32>
    %225 = math.rsqrt %224 : vector<16x1xf32>
    %226 = vector.broadcast %225 : vector<16x1xf32> to vector<16x128xf32>
    %227 = arith.mulf %222, %226 : vector<16x128xf32>
    %228 = vector.broadcast %5 : vector<1x128xf32> to vector<16x128xf32>
    %229 = arith.mulf %227, %228 : vector<16x128xf32>
    %230 = vector.broadcast %6 : vector<1x128xf32> to vector<16x128xf32>
    %231 = arith.addf %229, %230 : vector<16x128xf32>
    %232 = arith.addf %196, %231 : vector<16x128xf32>
    %233 = vector.shape_cast %232 : vector<16x128xf32> to vector<2x8x128xf32>
    %c0_64 = arith.constant 0 : index
    %c0_65 = arith.constant 0 : index
    %c0_66 = arith.constant 0 : index
    %234 = vector.load %arg9[%c0_64, %c0_65, %c0_66] : memref<2x8x128xf32, #tpu.memory_space<vmem>>, vector<2x8x128xf32>
    tpu.vector_store %arg9[%c0_64, %c0_65, %c0_66], %233 {strides = array<i32>} : memref<2x8x128xf32, #tpu.memory_space<vmem>>, vector<2x8x128xf32>,
    return
  }
  func.func @transform_0(%arg0: i32) -> (i32, i32, i32) {
    %c0_i32 = arith.constant 0 : i32
    %c0_i32_0 = arith.constant 0 : i32
    %c0_i32_1 = arith.constant 0 : i32
    return %arg0, %c0_i32, %c0_i32_0 : i32, i32, i32
  }
  func.func @transform_1(%arg0: i32) -> (i32, i32) {
    %c0_i32 = arith.constant 0 : i32
    %c0_i32_0 = arith.constant 0 : i32
    %c0_i32_1 = arith.constant 0 : i32
    return %c0_i32, %c0_i32_0 : i32, i32
  }
  func.func @transform_2(%arg0: i32) -> (i32, i32) {
    %c0_i32 = arith.constant 0 : i32
    %c0_i32_0 = arith.constant 0 : i32
    %c0_i32_1 = arith.constant 0 : i32
    return %c0_i32, %c0_i32_0 : i32, i32
  }
  func.func @transform_3(%arg0: i32) -> (i32, i32) {
    %c0_i32 = arith.constant 0 : i32
    %c0_i32_0 = arith.constant 0 : i32
    %c0_i32_1 = arith.constant 0 : i32
    return %c0_i32, %c0_i32_0 : i32, i32
  }
  func.func @transform_4(%arg0: i32) -> (i32, i32) {
    %c0_i32 = arith.constant 0 : i32
    %c0_i32_0 = arith.constant 0 : i32
    %c0_i32_1 = arith.constant 0 : i32
    return %c0_i32, %c0_i32_0 : i32, i32
  }
  func.func @transform_5(%arg0: i32) -> (i32, i32) {
    %c0_i32 = arith.constant 0 : i32
    %c0_i32_0 = arith.constant 0 : i32
    %c0_i32_1 = arith.constant 0 : i32
    return %c0_i32, %c0_i32_0 : i32, i32
  }
  func.func @transform_6(%arg0: i32) -> (i32, i32) {
    %c0_i32 = arith.constant 0 : i32
    %c0_i32_0 = arith.constant 0 : i32
    %c0_i32_1 = arith.constant 0 : i32
    return %c0_i32, %c0_i32_0 : i32, i32
  }
  func.func @transform_7(%arg0: i32) -> (i32, i32) {
    %c0_i32 = arith.constant 0 : i32
    %c0_i32_0 = arith.constant 0 : i32
    %c0_i32_1 = arith.constant 0 : i32
    return %c0_i32, %c0_i32_0 : i32, i32
  }
  func.func @transform_8(%arg0: i32) -> (i32, i32, i32) {
    %c0_i32 = arith.constant 0 : i32
    %c0_i32_0 = arith.constant 0 : i32
    %c0_i32_1 = arith.constant 0 : i32
    return %arg0, %c0_i32, %c0_i32_0 : i32, i32, i32
  }
}

</mosaic_0001>

<llo_original>
// kernel: tpu_custom_call.1
$region0: #{tpu_custom_call.1}
  #allocation0 [shape = 'u32[]', space=smem, size = 0x4, offset = 0x4, fixed_abs, tag = 'smem constant byte address 0x4 - core index']
  #allocation1 [shape = 'u32[144,128]{1,0:T(1,128)}', space=vmem, size = 0x12000, scoped, tag = 'internal scratch']
  %s0 = inlined_call_operand.hbm [shape: f32[4,8,128], index: 0, kind: input, shape index: {}]
  %s1 = inlined_call_operand.hbm [shape: bf16[128,384], index: 1, kind: input, shape index: {}]
  %s2 = inlined_call_operand.hbm [shape: bf16[128,128], index: 2, kind: input, shape index: {}]
  %s3 = inlined_call_operand.hbm [shape: bf16[128,256], index: 3, kind: input, shape index: {}]
  %s4 = inlined_call_operand.hbm [shape: bf16[256,128], index: 4, kind: input, shape index: {}]
  %s5 = inlined_call_operand.vmem [shape: f32[1,384], index: 5, kind: input, shape index: {}]
  %s6 = inlined_call_operand.vmem [shape: f32[1,256], index: 6, kind: input, shape index: {}]
  %s7 = inlined_call_operand.vmem [shape: f32[6,128], index: 7, kind: input, shape index: {}]
  %s8 = inlined_call_operand.hbm [shape: f32[4,8,128], index: 8, kind: output, shape index: {}]
  %s9 = sld [smem:[#allocation0]]
  $region85: #{tpu_custom_call.1} parent=0
    _
  %s11 = ssub.s32 1, %s9
  %s12 = scalar_select 0, %s11, %s9
  $region1: #{tpu_custom_call.1} parent=0
    #allocation2 [shape = 'u8[16384]{0}', space=vmem, size = 0x4000, scoped, tag = 'input window, operand 0']
    #allocation3 [shape = 's32[2]{0}', space=sflag, size = 0x8, scoped, tag = 'scoped memory for tpu_custom_call.1']
    #allocation4 [shape = 's32[2]{0}', space=sflag, size = 0x8, scoped, tag = 'scoped memory for tpu_custom_call.1']
    #allocation5 [shape = 'u8[98304]{0}', space=vmem, size = 0x18000, scoped, tag = 'input window, operand 1, single buffered']
    #allocation6 [shape = 's32[1]{0}', space=sflag, size = 0x4, scoped, tag = 'scoped memory for tpu_custom_call.1']
    #allocation7 [shape = 'u8[32768]{0}', space=vmem, size = 0x8000, scoped, tag = 'input window, operand 2, single buffered']
    #allocation8 [shape = 'u8[65536]{0}', space=vmem, size = 0x10000, scoped, tag = 'input window, operand 3, single buffered']
    #allocation9 [shape = 's32[1]{0}', space=sflag, size = 0x4, scoped, tag = 'scoped memory for tpu_custom_call.1']
    #allocation10 [shape = 'u8[65536]{0}', space=vmem, size = 0x10000, scoped, tag = 'input window, operand 4, single buffered']
    #allocation11 [shape = 'u8[16384]{0}', space=vmem, size = 0x4000, scoped, tag = 'output window, operand 0']
    %13 = vsyncpa [#allocation3], 0
    %s14 = scalar_lea.sflag [#allocation3], 1
    %15 = vsyncpa %s14, 0
    %16 = vsyncpa [#allocation6], 0
    %17 = vsyncpa [#allocation9], 0
    %18 = vsyncpa [#allocation4], 0
    %s19 = scalar_lea.sflag [#allocation4], 1
    %20 = vsyncpa %s19, 0
    loop: start=0, step=1, limit=4
    $region2: #{tpu_custom_call.1} parent=1 // loop_pre_header
      _
    $region3: #{tpu_custom_call.1} parent=1 // loop_header
      %s22 = sphi 0, %s26
      %p23 = scmp.ge.s32.totalorder %s22, 4
      %s32 = sphi 0, %s34
      %s35 = sphi 0, %s32
      %s36 = sphi 0, %s35
      %s52 = sphi 0, %s36
      %s56 = sphi 0, %s56
      %s58 = sphi 0, %s56
      %s59 = sphi 0, %s58
      %s73 = sphi 0, %s59
      %s77 = sphi 0, %s77
      %s79 = sphi 0, %s77
      %s80 = sphi 0, %s79
      %s94 = sphi 0, %s80
      %s98 = sphi 0, %s98
      %s100 = sphi 0, %s98
      %s101 = sphi 0, %s100
      %s115 = sphi 0, %s101
      %s119 = sphi 0, %s119
      %s121 = sphi 0, %s119
      %s122 = sphi 0, %s121
      %s136 = sphi 0, %s122
      %s140 = sphi 0, %s140
      %s142 = sphi 0, %s140
      %s143 = sphi 0, %s142
      %s157 = sphi 0, %s143
      %s161 = sphi 0, %s161
      %s163 = sphi 0, %s161
      %s164 = sphi 0, %s163
      %s178 = sphi 0, %s164
      %s182 = sphi 0, %s182
      %s184 = sphi 0, %s182
      %s185 = sphi 0, %s184
      %s199 = sphi 0, %s185
      %s205 = sphi 0, %s207
      %s208 = sphi 0, %s205
      %s209 = sphi 0, %s208
      %s225 = sphi 0, %s209
    $region4: #{tpu_custom_call.1} parent=1 // loop_header_branch
      %25 = sbr.rel (%p23) target = $region8
    $region5: #{tpu_custom_call.1} parent=1 // loop_body
      %s27 = ssub.s32 %s22, 1
      %s28 = ssub.s32 %s22, 2
      %s29 = sadd.s32 %s22, 1
      %s30 = ssub.s32 %s22, %s29
      %p31 = scmp.eq.s32.totalorder %s30, 0
      %s33 = sadd.s32 %s32, 1
      %s34 = scalar_select %p31, %s32, %s33
      %p37 = pneg %p31
      %p38 = scmp.eq.s32.totalorder %s22, 1
      %p39 = por %p37, %p38
      %p40 = scmp.ne.s32.totalorder %s32, %s35
      %p41 = scmp.eq.s32.totalorder %s22, 0
      %p42 = por %p40, %p41
      %p43 = scmp.ne.s32.totalorder %s32, %s35
      %p44 = scmp.eq.s32.totalorder %s27, 1
      %p45 = por %p43, %p44
      %p46 = scmp.ne.s32.totalorder %s35, %s36
      %p47 = scmp.eq.s32.totalorder %s27, 0
      %p48 = por %p46, %p47
      %p49 = scmp.ne.s32.totalorder %s35, %s36
      %p50 = scmp.eq.s32.totalorder %s28, 1
      %p51 = por %p49, %p50
      %p53 = scmp.ne.s32.totalorder %s36, %s52
      %p54 = scmp.eq.s32.totalorder %s28, 0
      %p55 = por %p53, %p54
      %s57 = sadd.s32 %s56, 1
      %p60 = scmp.eq.s32.totalorder %s22, 1
      %p61 = scmp.ne.s32.totalorder %s56, %s58
      %p62 = scmp.eq.s32.totalorder %s22, 0
      %p63 = por %p61, %p62
      %p64 = scmp.ne.s32.totalorder %s56, %s58
      %p65 = scmp.eq.s32.totalorder %s27, 1
      %p66 = por %p64, %p65
      %p67 = scmp.ne.s32.totalorder %s58, %s59
      %p68 = scmp.eq.s32.totalorder %s27, 0
      %p69 = por %p67, %p68
      %p70 = scmp.ne.s32.totalorder %s58, %s59
      %p71 = scmp.eq.s32.totalorder %s28, 1
      %p72 = por %p70, %p71
      %p74 = scmp.ne.s32.totalorder %s59, %s73
      %p75 = scmp.eq.s32.totalorder %s28, 0
      %p76 = por %p74, %p75
      %s78 = sadd.s32 %s77, 1
      %p81 = scmp.eq.s32.totalorder %s22, 1
      %p82 = scmp.ne.s32.totalorder %s77, %s79
      %p83 = scmp.eq.s32.totalorder %s22, 0
      %p84 = por %p82, %p83
      %p85 = scmp.ne.s32.totalorder %s77, %s79
      %p86 = scmp.eq.s32.totalorder %s27, 1
      %p87 = por %p85, %p86
      %p88 = scmp.ne.s32.totalorder %s79, %s80
      %p89 = scmp.eq.s32.totalorder %s27, 0
      %p90 = por %p88, %p89
      %p91 = scmp.ne.s32.totalorder %s79, %s80
      %p92 = scmp.eq.s32.totalorder %s28, 1
      %p93 = por %p91, %p92
      %p95 = scmp.ne.s32.totalorder %s80, %s94
      %p96 = scmp.eq.s32.totalorder %s28, 0
      %p97 = por %p95, %p96
      %s99 = sadd.s32 %s98, 1
      %p102 = scmp.eq.s32.totalorder %s22, 1
      %p103 = scmp.ne.s32.totalorder %s98, %s100
      %p104 = scmp.eq.s32.totalorder %s22, 0
      %p105 = por %p103, %p104
      %p106 = scmp.ne.s32.totalorder %s98, %s100
      %p107 = scmp.eq.s32.totalorder %s27, 1
      %p108 = por %p106, %p107
      %p109 = scmp.ne.s32.totalorder %s100, %s101
      %p110 = scmp.eq.s32.totalorder %s27, 0
      %p111 = por %p109, %p110
      %p112 = scmp.ne.s32.totalorder %s100, %s101
      %p113 = scmp.eq.s32.totalorder %s28, 1
      %p114 = por %p112, %p113
      %p116 = scmp.ne.s32.totalorder %s101, %s115
      %p117 = scmp.eq.s32.totalorder %s28, 0
      %p118 = por %p116, %p117
      %s120 = sadd.s32 %s119, 1
      %p123 = scmp.eq.s32.totalorder %s22, 1
      %p124 = scmp.ne.s32.totalorder %s119, %s121
      %p125 = scmp.eq.s32.totalorder %s22, 0
      %p126 = por %p124, %p125
      %p127 = scmp.ne.s32.totalorder %s119, %s121
      %p128 = scmp.eq.s32.totalorder %s27, 1
      %p129 = por %p127, %p128
      %p130 = scmp.ne.s32.totalorder %s121, %s122
      %p131 = scmp.eq.s32.totalorder %s27, 0
      %p132 = por %p130, %p131
      %p133 = scmp.ne.s32.totalorder %s121, %s122
      %p134 = scmp.eq.s32.totalorder %s28, 1
      %p135 = por %p133, %p134
      %p137 = scmp.ne.s32.totalorder %s122, %s136
      %p138 = scmp.eq.s32.totalorder %s28, 0
      %p139 = por %p137, %p138
      %s141 = sadd.s32 %s140, 1
      %p144 = scmp.eq.s32.totalorder %s22, 1
      %p145 = scmp.ne.s32.totalorder %s140, %s142
      %p146 = scmp.eq.s32.totalorder %s22, 0
      %p147 = por %p145, %p146
      %p148 = scmp.ne.s32.totalorder %s140, %s142
      %p149 = scmp.eq.s32.totalorder %s27, 1
      %p150 = por %p148, %p149
      %p151 = scmp.ne.s32.totalorder %s142, %s143
      %p152 = scmp.eq.s32.totalorder %s27, 0
      %p153 = por %p151, %p152
      %p154 = scmp.ne.s32.totalorder %s142, %s143
      %p155 = scmp.eq.s32.totalorder %s28, 1
      %p156 = por %p154, %p155
      %p158 = scmp.ne.s32.totalorder %s143, %s157
      %p159 = scmp.eq.s32.totalorder %s28, 0
      %p160 = por %p158, %p159
      %s162 = sadd.s32 %s161, 1
      %p165 = scmp.eq.s32.totalorder %s22, 1
      %p166 = scmp.ne.s32.totalorder %s161, %s163
      %p167 = scmp.eq.s32.totalorder %s22, 0
      %p168 = por %p166, %p167
      %p169 = scmp.ne.s32.totalorder %s161, %s163
      %p170 = scmp.eq.s32.totalorder %s27, 1
      %p171 = por %p169, %p170
      %p172 = scmp.ne.s32.totalorder %s163, %s164
      %p173 = scmp.eq.s32.totalorder %s27, 0
      %p174 = por %p172, %p173
      %p175 = scmp.ne.s32.totalorder %s163, %s164
      %p176 = scmp.eq.s32.totalorder %s28, 1
      %p177 = por %p175, %p176
      %p179 = scmp.ne.s32.totalorder %s164, %s178
      %p180 = scmp.eq.s32.totalorder %s28, 0
      %p181 = por %p179, %p180
      %s183 = sadd.s32 %s182, 1
      %p186 = scmp.eq.s32.totalorder %s22, 1
      %p187 = scmp.ne.s32.totalorder %s182, %s184
      %p188 = scmp.eq.s32.totalorder %s22, 0
      %p189 = por %p187, %p188
      %p190 = scmp.ne.s32.totalorder %s182, %s184
      %p191 = scmp.eq.s32.totalorder %s27, 1
      %p192 = por %p190, %p191
      %p193 = scmp.ne.s32.totalorder %s184, %s185
      %p194 = scmp.eq.s32.totalorder %s27, 0
      %p195 = por %p193, %p194
      %p196 = scmp.ne.s32.totalorder %s184, %s185
      %p197 = scmp.eq.s32.totalorder %s28, 1
      %p198 = por %p196, %p197
      %p200 = scmp.ne.s32.totalorder %s185, %s199
      %p201 = scmp.eq.s32.totalorder %s28, 0
      %p202 = por %p200, %p201
      %s203 = ssub.s32 %s22, %s29
      %p204 = scmp.eq.s32.totalorder %s203, 0
      %s206 = sadd.s32 %s205, 1
      %s207 = scalar_select %p204, %s205, %s206
      %p210 = pneg %p204
      %p211 = scmp.eq.s32.totalorder %s22, 1
      %p212 = por %p210, %p211
      %p213 = scmp.ne.s32.totalorder %s205, %s208
      %p214 = scmp.eq.s32.totalorder %s22, 0
      %p215 = por %p213, %p214
      %p216 = scmp.ne.s32.totalorder %s205, %s208
      %p217 = scmp.eq.s32.totalorder %s27, 1
      %p218 = por %p216, %p217
      %p219 = scmp.ne.s32.totalorder %s208, %s209
      %p220 = scmp.eq.s32.totalorder %s27, 0
      %p221 = por %p219, %p220
      %p222 = scmp.ne.s32.totalorder %s208, %s209
      %p223 = scmp.eq.s32.totalorder %s28, 1
      %p224 = por %p222, %p223
      %p226 = scmp.ne.s32.totalorder %s209, %s225
      %p227 = scmp.eq.s32.totalorder %s28, 0
      %p228 = por %p226, %p227
      %p229 = scmp.le.s32.totalorder 1, %s22
      %p230 = scmp.lt.s32.totalorder %s22, 3
      %p231 = pnand %p229, %p230
      %p232 = pneg %p231
      // Predicated region
      $region9: #{tpu_custom_call.1} parent=5 // pred_check
        _
      $region10: #{tpu_custom_call.1} parent=5 // pred_check_branch
        %234 = sbr.rel (%p231) target = $region12
      $region11: #{tpu_custom_call.1} parent=5 // pred_region
        %s235 = ssub.s32 %s22, 1
        // Predicated region
        $region13: #{tpu_custom_call.1} parent=11 // pred_check
          %p236 = pneg %p69
        $region14: #{tpu_custom_call.1} parent=11 // pred_check_branch
          %238 = sbr.rel (%p236) target = $region16
        $region15: #{tpu_custom_call.1} parent=11 // pred_region
          %s240 = ssub.s32 3072, 3072
          %241 = vsyncadd [#allocation6], %s240
          %s242 = sshll.u32 [#allocation5], 4
          %s243 = int_to_ptr.vmem [resolvable:$true] %s242
          %248 = dma.hbm_to_vmem [thread:$0]  %s1, 3072, %s243, [#allocation6], 192, 192, 12
        $region16: #{tpu_custom_call.1} parent=11 // pred_fallthru
          _
        // Predicated region
        $region17: #{tpu_custom_call.1} parent=11 // pred_check
          %p249 = pneg %p90
        $region18: #{tpu_custom_call.1} parent=11 // pred_check_branch
          %251 = sbr.rel (%p249) target = $region20
        $region19: #{tpu_custom_call.1} parent=11 // pred_region
          %s253 = ssub.s32 1024, 1024
          %254 = vsyncadd [#allocation6], %s253
          %s255 = sshll.u32 [#allocation7], 4
          %s256 = int_to_ptr.vmem [resolvable:$true] %s255
          %261 = dma.hbm_to_vmem [thread:$0]  %s2, 1024, %s256, [#allocation6], 64, 64, 4
        $region20: #{tpu_custom_call.1} parent=11 // pred_fallthru
          _
        // Predicated region
        $region21: #{tpu_custom_call.1} parent=11 // pred_check
          %p262 = pneg %p111
        $region22: #{tpu_custom_call.1} parent=11 // pred_check_branch
          %264 = sbr.rel (%p262) target = $region24
        $region23: #{tpu_custom_call.1} parent=11 // pred_region
          %s266 = ssub.s32 2048, 2048
          %267 = vsyncadd [#allocation9], %s266
          %s268 = sshll.u32 [#allocation8], 4
          %s269 = int_to_ptr.vmem [resolvable:$true] %s268
          %274 = dma.hbm_to_vmem [thread:$0]  %s3, 2048, %s269, [#allocation9], 128, 128, 8
        $region24: #{tpu_custom_call.1} parent=11 // pred_fallthru
          _
        // Predicated region
        $region25: #{tpu_custom_call.1} parent=11 // pred_check
          %p275 = pneg %p132
        $region26: #{tpu_custom_call.1} parent=11 // pred_check_branch
          %277 = sbr.rel (%p275) target = $region28
        $region27: #{tpu_custom_call.1} parent=11 // pred_region
          %s279 = ssub.s32 2048, 2048
          %280 = vsyncadd [#allocation9], %s279
          %s281 = sshll.u32 [#allocation10], 4
          %s282 = int_to_ptr.vmem [resolvable:$true] %s281
          %287 = dma.hbm_to_vmem [thread:$0]  %s4, 2048, %s282, [#allocation9], 64, 64, 4
        $region28: #{tpu_custom_call.1} parent=11 // pred_fallthru
          _
        // Predicated region
        $region29: #{tpu_custom_call.1} parent=11 // pred_check
          %p288 = pneg %p153
        $region30: #{tpu_custom_call.1} parent=11 // pred_check_branch
          %290 = sbr.rel (%p288) target = $region32
        $region31: #{tpu_custom_call.1} parent=11 // pred_region
          _
        $region32: #{tpu_custom_call.1} parent=11 // pred_fallthru
          _
        // Predicated region
        $region33: #{tpu_custom_call.1} parent=11 // pred_check
          %p291 = pneg %p174
        $region34: #{tpu_custom_call.1} parent=11 // pred_check_branch
          %293 = sbr.rel (%p291) target = $region36
        $region35: #{tpu_custom_call.1} parent=11 // pred_region
          _
        $region36: #{tpu_custom_call.1} parent=11 // pred_fallthru
          _
        // Predicated region
        $region37: #{tpu_custom_call.1} parent=11 // pred_check
          %p294 = pneg %p195
        $region38: #{tpu_custom_call.1} parent=11 // pred_check_branch
          %296 = sbr.rel (%p294) target = $region40
        $region39: #{tpu_custom_call.1} parent=11 // pred_region
          _
        $region40: #{tpu_custom_call.1} parent=11 // pred_fallthru
          _
      $region12: #{tpu_custom_call.1} parent=5 // pred_fallthru
        _
      %p297 = scmp.lt.s32.totalorder %s22, 2
      // Predicated region
      $region41: #{tpu_custom_call.1} parent=5 // pred_check
        %p298 = pneg %p297
      $region42: #{tpu_custom_call.1} parent=5 // pred_check_branch
        %300 = sbr.rel (%p298) target = $region44
      $region43: #{tpu_custom_call.1} parent=5 // pred_region
        // Predicated region
        $region45: #{tpu_custom_call.1} parent=43 // pred_check
          %p301 = pneg %p42
        $region46: #{tpu_custom_call.1} parent=43 // pred_check_branch
          %303 = sbr.rel (%p301) target = $region48
        $region47: #{tpu_custom_call.1} parent=43 // pred_region
          %s304 = sand.u32 %s32, 1
          %s305 = scalar_lea.sflag [#allocation3], %s304
          %s306 = sand.u32 %s32, 1
          %s307 = smul.addr %s306, 16
          %s308 = scalar_lea.vmem [#allocation2], %s307
          %s309 = smul.u32 2, %s22
          %s311 = ssub.s32 256, 256
          %312 = vsyncadd %s305, %s311
          %s313 = smul.addr %s309, 128
          %s314 = scalar_lea.hbm %s0, %s313
          %s315 = sshll.u32 %s308, 4
          %s316 = int_to_ptr.vmem [resolvable:$true] %s315
          %321 = dma.hbm_to_vmem [thread:$0]  %s314, 256, %s316, %s305, 128, 128, 8
        $region48: #{tpu_custom_call.1} parent=43 // pred_fallthru
          _
      $region44: #{tpu_custom_call.1} parent=5 // pred_fallthru
        _
      %p322 = scmp.le.s32.totalorder 1, %s22
      %p323 = scmp.lt.s32.totalorder %s22, 3
      %p324 = pnand %p322, %p323
      %p325 = pneg %p324
      // Predicated region
      $region49: #{tpu_custom_call.1} parent=5 // pred_check
        _
      $region50: #{tpu_custom_call.1} parent=5 // pred_check_branch
        %327 = sbr.rel (%p324) target = $region52
      $region51: #{tpu_custom_call.1} parent=5 // pred_region
        %s328 = ssub.s32 %s22, 1
        %s329 = sand.u32 %s35, 1
        %s330 = scalar_lea.sflag [#allocation3], %s329
        %s331 = sand.u32 %s35, 1
        %s332 = smul.addr %s331, 16
        %s333 = scalar_lea.vmem [#allocation2], %s332
        // Predicated region
        $region53: #{tpu_custom_call.1} parent=51 // pred_check
          %p334 = pneg %p48
        $region54: #{tpu_custom_call.1} parent=51 // pred_check_branch
          %336 = sbr.rel (%p334) target = $region56
        $region55: #{tpu_custom_call.1} parent=51 // pred_region
          %337 = dma.done %s330, 256
        $region56: #{tpu_custom_call.1} parent=51 // pred_fallthru
          _
        // Predicated region
        $region57: #{tpu_custom_call.1} parent=51 // pred_check
          %p338 = pneg %p69
        $region58: #{tpu_custom_call.1} parent=51 // pred_check_branch
          %340 = sbr.rel (%p338) target = $region60
        $region59: #{tpu_custom_call.1} parent=51 // pred_region
          %341 = dma.done [#allocation6], 3072
        $region60: #{tpu_custom_call.1} parent=51 // pred_fallthru
          _
        // Predicated region
        $region61: #{tpu_custom_call.1} parent=51 // pred_check
          %p342 = pneg %p90
        $region62: #{tpu_custom_call.1} parent=51 // pred_check_branch
          %344 = sbr.rel (%p342) target = $region64
        $region63: #{tpu_custom_call.1} parent=51 // pred_region
          %345 = dma.done [#allocation6], 1024
        $region64: #{tpu_custom_call.1} parent=51 // pred_fallthru
          _
        // Predicated region
        $region65: #{tpu_custom_call.1} parent=51 // pred_check
          %p346 = pneg %p111
        $region66: #{tpu_custom_call.1} parent=51 // pred_check_branch
          %348 = sbr.rel (%p346) target = $region68
        $region67: #{tpu_custom_call.1} parent=51 // pred_region
          %349 = dma.done [#allocation9], 2048
        $region68: #{tpu_custom_call.1} parent=51 // pred_fallthru
          _
        // Predicated region
        $region69: #{tpu_custom_call.1} parent=51 // pred_check
          %p350 = pneg %p132
        $region70: #{tpu_custom_call.1} parent=51 // pred_check_branch
          %352 = sbr.rel (%p350) target = $region72
        $region71: #{tpu_custom_call.1} parent=51 // pred_region
          %353 = dma.done [#allocation9], 2048
        $region72: #{tpu_custom_call.1} parent=51 // pred_fallthru
          _
        %s354 = sand.u32 %s35, 1
        %s355 = scalar_lea.sflag [#allocation3], %s354
        %s356 = sand.u32 %s35, 1
        %s357 = smul.addr %s356, 16
        %s358 = scalar_lea.vmem [#allocation2], %s357
        %p359 = pneg %p48
        %p360 = pneg %p45
        %p361 = pneg %p69
        %p362 = pneg %p66
        %p363 = pneg %p90
        %p364 = pneg %p87
        %p365 = pneg %p111
        %p366 = pneg %p108
        %p367 = pneg %p132
        %p368 = pneg %p129
        %p369 = pneg %p153
        %p370 = pneg %p150
        %p371 = pneg %p174
        %p372 = pneg %p171
        %p373 = pneg %p195
        %p374 = pneg %p192
        %p375 = pneg %p221
        %p376 = pneg %p218
        %s377 = sand.u32 %s208, 1
        %s378 = scalar_lea.sflag [#allocation4], %s377
        %s379 = sand.u32 %s208, 1
        %s380 = smul.addr %s379, 16
        %s381 = scalar_lea.vmem [#allocation11], %s380
        %s382 = smul.u32 2, %s27
        %s383 = smul.u32 2, %s27
        %v385 = vld [vmem:[%s7] sm:$0x3f]
        %v386 = vld [vmem:[%s333] sm:$0xff]
        %v387 = vld [vmem:[%s333 + $0x8] sm:$0xff]
        %v388 = vpack.c.bf16 %v387, %v386
        %v389 = vld [vmem:[#allocation5] sm:$0xff]
        %v390 = vld [vmem:[#allocation5 + $0x8] sm:$0xf]
        %v391 = vld [vmem:[#allocation5 + $0xc] sm:$0xff]
        %v392 = vld [vmem:[#allocation5 + $0x14] sm:$0xf]
        %v393 = vld [vmem:[#allocation5 + $0x18] sm:$0xff]
        %v394 = vld [vmem:[#allocation5 + $0x20] sm:$0xf]
        %v395 = vld [vmem:[#allocation5 + $0x24] sm:$0xff]
        %v396 = vld [vmem:[#allocation5 + $0x2c] sm:$0xf]
        %v397 = vld [vmem:[#allocation5 + $0x30] sm:$0xff]
        %v398 = vld [vmem:[#allocation5 + $0x38] sm:$0xf]
        %v399 = vld [vmem:[#allocation5 + $0x3c] sm:$0xff]
        %v400 = vld [vmem:[#allocation5 + $0x44] sm:$0xf]
        %v401 = vld [vmem:[#allocation5 + $0x48] sm:$0xff]
        %v402 = vld [vmem:[#allocation5 + $0x50] sm:$0xf]
        %v403 = vld [vmem:[#allocation5 + $0x54] sm:$0xff]
        %v404 = vld [vmem:[#allocation5 + $0x5c] sm:$0xf]
        %v405 = vld [vmem:[#allocation5 + $0x60] sm:$0xff]
        %v406 = vld [vmem:[#allocation5 + $0x68] sm:$0xf]
        %v407 = vld [vmem:[#allocation5 + $0x6c] sm:$0xff]
        %v408 = vld [vmem:[#allocation5 + $0x74] sm:$0xf]
        %v409 = vld [vmem:[#allocation5 + $0x78] sm:$0xff]
        %v410 = vld [vmem:[#allocation5 + $0x80] sm:$0xf]
        %v411 = vld [vmem:[#allocation5 + $0x84] sm:$0xff]
        %v412 = vld [vmem:[#allocation5 + $0x8c] sm:$0xf]
        %v413 = vld [vmem:[#allocation5 + $0x90] sm:$0xff]
        %v414 = vld [vmem:[#allocation5 + $0x98] sm:$0xf]
        %v415 = vld [vmem:[#allocation5 + $0x9c] sm:$0xff]
        %v416 = vld [vmem:[#allocation5 + $0xa4] sm:$0xf]
        %v417 = vld [vmem:[#allocation5 + $0xa8] sm:$0xff]
        %v418 = vld [vmem:[#allocation5 + $0xb0] sm:$0xf]
        %v419 = vld [vmem:[#allocation5 + $0xb4] sm:$0xff]
        %v420 = vld [vmem:[#allocation5 + $0xbc] sm:$0xf]
        %v421 = vld [vmem:[%s5] sm:$0x7]
        %v423 = vlaneseq
        %v424 = vshrl.u32 %v423, 7
        %v425 = vsub.s32 0, %v424
        %v426 = vrot.slane %v421, %v425
        %v427 = vlaneseq
        %v428 = vshrl.u32 %v427, 7
        %v429 = vsub.s32 1, %v428
        %v430 = vrot.slane %v421, %v429
        %v431 = vlaneseq
        %v432 = vshrl.u32 %v431, 7
        %v433 = vsub.s32 2, %v432
        %v434 = vrot.slane %v421, %v433
        %v470 = vunpack.c.l.b16 %v389
        %v471 = vunpack.c.h.b16 %v389
        %v472 = vunpack.c.l.b16 %v390
        %v473 = vunpack.c.l.b16 %v391
        %v474 = vunpack.c.h.b16 %v391
        %v475 = vunpack.c.l.b16 %v392
        %v476 = vunpack.c.l.b16 %v393
        %v477 = vunpack.c.h.b16 %v393
        %v478 = vunpack.c.l.b16 %v394
        %v479 = vunpack.c.l.b16 %v395
        %v480 = vunpack.c.h.b16 %v395
        %v481 = vunpack.c.l.b16 %v396
        %v482 = vunpack.c.l.b16 %v397
        %v483 = vunpack.c.h.b16 %v397
        %v484 = vunpack.c.l.b16 %v398
        %v485 = vunpack.c.l.b16 %v399
        %v486 = vunpack.c.h.b16 %v399
        %v487 = vunpack.c.l.b16 %v400
        %v488 = vunpack.c.l.b16 %v401
        %v489 = vunpack.c.h.b16 %v401
        %v490 = vunpack.c.l.b16 %v402
        %v491 = vunpack.c.l.b16 %v403
        %v492 = vunpack.c.h.b16 %v403
        %v493 = vunpack.c.l.b16 %v404
        %v494 = vunpack.c.l.b16 %v405
        %v495 = vunpack.c.h.b16 %v405
        %v496 = vunpack.c.l.b16 %v406
        %v497 = vunpack.c.l.b16 %v407
        %v498 = vunpack.c.h.b16 %v407
        %v499 = vunpack.c.l.b16 %v408
        %v500 = vunpack.c.l.b16 %v409
        %v501 = vunpack.c.h.b16 %v409
        %v502 = vunpack.c.l.b16 %v410
        %v503 = vunpack.c.l.b16 %v411
        %v504 = vunpack.c.h.b16 %v411
        %v505 = vunpack.c.l.b16 %v412
        %v506 = vunpack.c.l.b16 %v413
        %v507 = vunpack.c.h.b16 %v413
        %v508 = vunpack.c.l.b16 %v414
        %v509 = vunpack.c.l.b16 %v415
        %v510 = vunpack.c.h.b16 %v415
        %v511 = vunpack.c.l.b16 %v416
        %v512 = vunpack.c.l.b16 %v417
        %v513 = vunpack.c.h.b16 %v417
        %v514 = vunpack.c.l.b16 %v418
        %v515 = vunpack.c.l.b16 %v419
        %v516 = vunpack.c.h.b16 %v419
        %v517 = vunpack.c.l.b16 %v420
        %v518 = vpack.c.b16 %v473, %v470
        %v519 = vpack.c.b16 %v474, %v471
        %v520 = vpack.c.b16 %v475, %v472
        %v521 = vpack.c.b16 %v479, %v476
        %v522 = vpack.c.b16 %v480, %v477
        %v523 = vpack.c.b16 %v481, %v478
        %v524 = vpack.c.b16 %v485, %v482
        %v525 = vpack.c.b16 %v486, %v483
        %v526 = vpack.c.b16 %v487, %v484
        %v527 = vpack.c.b16 %v491, %v488
        %v528 = vpack.c.b16 %v492, %v489
        %v529 = vpack.c.b16 %v493, %v490
        %v530 = vpack.c.b16 %v497, %v494
        %v531 = vpack.c.b16 %v498, %v495
        %v532 = vpack.c.b16 %v499, %v496
        %v533 = vpack.c.b16 %v503, %v500
        %v534 = vpack.c.b16 %v504, %v501
        %v535 = vpack.c.b16 %v505, %v502
        %v536 = vpack.c.b16 %v509, %v506
        %v537 = vpack.c.b16 %v510, %v507
        %v538 = vpack.c.b16 %v511, %v508
        %v539 = vpack.c.b16 %v515, %v512
        %v540 = vpack.c.b16 %v516, %v513
        %v541 = vpack.c.b16 %v517, %v514
        %566 = vmatprep.subr.bf16.mxu0 %v519
        %567 = vmatpush1.bf16.msra.mxu0 %v518
        %568 = vmatprep.subr.bf16.mxu0 %v522
        %569 = vmatpush1.bf16.msra.mxu0 %v521
        %570 = vmatprep.subr.bf16.mxu0 %v525
        %571 = vmatpush1.bf16.msra.mxu0 %v524
        %572 = vmatprep.subr.bf16.mxu0 %v528
        %573 = vmatpush1.bf16.msra.mxu0 %v527
        %574 = vmatprep.subr.bf16.mxu0 %v531
        %575 = vmatpush1.bf16.msra.mxu0 %v530
        %576 = vmatprep.subr.bf16.mxu0 %v534
        %577 = vmatpush1.bf16.msra.mxu0 %v533
        %578 = vmatprep.subr.bf16.mxu0 %v537
        %579 = vmatpush1.bf16.msra.mxu0 %v536
        %580 = vmatprep.subr.bf16.mxu0 %v540
        %581 = vmatpush1.bf16.msra.mxu0 %v539
        %582 = vmatprep.subr.bf16.mxu0 0
        %583 = vmatpush1.bf16.msra.mxu0 0
        %584 = vmatprep.subr.bf16.mxu0 0
        %585 = vmatpush1.bf16.msra.mxu0 0
        %586 = vmatprep.subr.bf16.mxu0 0
        %587 = vmatpush1.bf16.msra.mxu0 0
        %588 = vmatprep.subr.bf16.mxu0 0
        %589 = vmatpush1.bf16.msra.mxu0 0
        %590 = vmatprep.subr.bf16.mxu0 0
        %591 = vmatpush1.bf16.msra.mxu0 0
        %592 = vmatprep.subr.bf16.mxu0 0
        %593 = vmatpush1.bf16.msra.mxu0 0
        %594 = vmatprep.subr.bf16.mxu0 0
        %595 = vmatpush1.bf16.msra.mxu0 0
        %596 = vmatprep.subr.bf16.mxu0 0
        %597 = vmatpush1.bf16.msra.mxu0 0
        %598 = vmatprep.mubr.bf16.mxu0 0
        %599 = vmatmul.mubr.bf16.gmra.mrb[0].mxu0 %v388
        %v600 = vpop.f32.mrb[0].mxu0
        %v601 = vadd.f32 %v426, %v600
        %v602 = vpop.f32.mrb[0].mxu0
        %v603 = vadd.f32 %v430, %v602
        %v604 = vpop.f32.mrb[0].mxu0
        %v605 = vadd.f32 %v426, %v604
        %v606 = vpop.f32.mrb[0].mxu0
        %v607 = vadd.f32 %v430, %v606
        %608 = vdwg.mxu0
        %609 = vmatprep.subr.bf16.mxu0 0
        %610 = vmatpush1.bf16.msra.mxu0 %v520
        %611 = vmatprep.subr.bf16.mxu0 0
        %612 = vmatpush1.bf16.msra.mxu0 %v523
        %613 = vmatprep.subr.bf16.mxu0 0
        %614 = vmatpush1.bf16.msra.mxu0 %v526
        %615 = vmatprep.subr.bf16.mxu0 0
        %616 = vmatpush1.bf16.msra.mxu0 %v529
        %617 = vmatprep.subr.bf16.mxu0 0
        %618 = vmatpush1.bf16.msra.mxu0 %v532
        %619 = vmatprep.subr.bf16.mxu0 0
        %620 = vmatpush1.bf16.msra.mxu0 %v535
        %621 = vmatprep.subr.bf16.mxu0 0
        %622 = vmatpush1.bf16.msra.mxu0 %v538
        %623 = vmatprep.subr.bf16.mxu0 0
        %624 = vmatpush1.bf16.msra.mxu0 %v541
        %625 = vmatprep.subr.bf16.mxu0 0
        %626 = vmatpush1.bf16.msra.mxu0 0
        %627 = vmatprep.subr.bf16.mxu0 0
        %628 = vmatpush1.bf16.msra.mxu0 0
        %629 = vmatprep.subr.bf16.mxu0 0
        %630 = vmatpush1.bf16.msra.mxu0 0
        %631 = vmatprep.subr.bf16.mxu0 0
        %632 = vmatpush1.bf16.msra.mxu0 0
        %633 = vmatprep.subr.bf16.mxu0 0
        %634 = vmatpush1.bf16.msra.mxu0 0
        %635 = vmatprep.subr.bf16.mxu0 0
        %636 = vmatpush1.bf16.msra.mxu0 0
        %637 = vmatprep.subr.bf16.mxu0 0
        %638 = vmatpush1.bf16.msra.mxu0 0
        %639 = vmatprep.subr.bf16.mxu0 0
        %640 = vmatpush1.bf16.msra.mxu0 0
        %641 = vmatprep.mubr.bf16.mxu0 0
        %642 = vmatmul.mubr.bf16.gmra.mrb[0].mxu0 %v388
        %v643 = vpop.f32.mrb[0].mxu0
        %v644 = vadd.f32 %v434, %v643
        %v645 = vpop.f32.mrb[0].mxu0
        %v646 = vpop.f32.mrb[0].mxu0
        %v647 = vadd.f32 %v434, %v646
        %v648 = vpop.f32.mrb[0].mxu0
        %649 = vdwg.mxu0
        %v650 = vmul.f32 %v601, 0.17677669
        %v651 = vmul.f32 %v605, 0.17677669
        %v652 = vpack.c.bf16 %v651, %v650
        %v653 = vpack.c.bf16 %v607, %v603
        %v654 = vpack.c.bf16 %v647, %v644
        %vm655 = vcmask 261120
        %v657 = vsel %vm655, %v652, 0
        %v660 = vsel %vm655, %v653, 0
        %662 = vmatprep.subr.bf16.mxu0 0
        %663 = vmatpush1.bf16.xpose.msra.mxu0 %v660
        %664 = vmatprep.subr.bf16.mxu0 0
        %665 = vmatpush1.bf16.xpose.msra.mxu0 0
        %666 = vmatprep.subr.bf16.mxu0 0
        %667 = vmatpush1.bf16.xpose.msra.mxu0 0
        %668 = vmatprep.subr.bf16.mxu0 0
        %669 = vmatpush1.bf16.xpose.msra.mxu0 0
        %670 = vmatprep.subr.bf16.mxu0 0
        %671 = vmatpush1.bf16.xpose.msra.mxu0 0
        %672 = vmatprep.subr.bf16.mxu0 0
        %673 = vmatpush1.bf16.xpose.msra.mxu0 0
        %674 = vmatprep.subr.bf16.mxu0 0
        %675 = vmatpush1.bf16.xpose.msra.mxu0 0
        %676 = vmatprep.subr.bf16.mxu0 0
        %677 = vmatpush1.bf16.xpose.msra.mxu0 0
        %678 = vmatprep.subr.bf16.mxu0 0
        %679 = vmatpush1.bf16.xpose.msra.mxu0 0
        %680 = vmatprep.subr.bf16.mxu0 0
        %681 = vmatpush1.bf16.xpose.msra.mxu0 0
        %682 = vmatprep.subr.bf16.mxu0 0
        %683 = vmatpush1.bf16.xpose.msra.mxu0 0
        %684 = vmatprep.subr.bf16.mxu0 0
        %685 = vmatpush1.bf16.xpose.msra.mxu0 0
        %686 = vmatprep.subr.bf16.mxu0 0
        %687 = vmatpush1.bf16.xpose.msra.mxu0 0
        %688 = vmatprep.subr.bf16.mxu0 0
        %689 = vmatpush1.bf16.xpose.msra.mxu0 0
        %690 = vmatprep.subr.bf16.mxu0 0
        %691 = vmatpush1.bf16.xpose.msra.mxu0 0
        %692 = vmatprep.subr.bf16.mxu0 0
        %693 = vmatpush1.bf16.xpose.msra.mxu0 0
        %694 = vmatprep.mubr.bf16.mxu0 0
        %695 = vmatmul.mubr.bf16.gmra.mrb[0].mxu0 %v657
        %v696 = vpop.f32.mrb[0].mxu0
        %v697 = vadd.f32 0.0, %v696
        %v698 = vpop.f32.mrb[0].mxu0
        %v699 = vpop.f32.mrb[0].mxu0
        %v700 = vpop.f32.mrb[0].mxu0
        %701 = vdwg.mxu0
        %vm702 = vcmask 64512
        %v703 = vsel %vm702, %v697, -inf
        %704 = vmax.xlane.f32.xlu0 %v703
        %v705 = vpop.xlane.xlu0 %704
        %v706 = vsub.f32 %v697, %v705
        %v707 = vmul.f32 %v706, 1.442695
        %v708 = vpow.pop %v707
        %v709 = vsel %vm702, %v708, 0.0
        %710 = vadd.xlane.f32.xlu0 %v709
        %v711 = vpop.xlane.xlu0 %710
        %v712 = vrcp.pop %v711
        %v713 = vmul.f32 %v708, %v712
        %v714 = vpack.c.bf16 %v713, %v713
        %v716 = vsel %vm702, %v714, 0
        %vm718 = vcmask 1043456
        %v720 = vsel %vm718, %v654, 0
        %722 = vmatprep.subr.bf16.mxu0 0
        %723 = vmatpush1.bf16.msra.mxu0 %v720
        %724 = vmatprep.subr.bf16.mxu0 0
        %725 = vmatpush1.bf16.msra.mxu0 0
        %726 = vmatprep.subr.bf16.mxu0 0
        %727 = vmatpush1.bf16.msra.mxu0 0
        %728 = vmatprep.subr.bf16.mxu0 0
        %729 = vmatpush1.bf16.msra.mxu0 0
        %730 = vmatprep.subr.bf16.mxu0 0
        %731 = vmatpush1.bf16.msra.mxu0 0
        %732 = vmatprep.subr.bf16.mxu0 0
        %733 = vmatpush1.bf16.msra.mxu0 0
        %734 = vmatprep.subr.bf16.mxu0 0
        %735 = vmatpush1.bf16.msra.mxu0 0
        %736 = vmatprep.subr.bf16.mxu0 0
        %737 = vmatpush1.bf16.msra.mxu0 0
        %738 = vmatprep.subr.bf16.mxu0 0
        %739 = vmatpush1.bf16.msra.mxu0 0
        %740 = vmatprep.subr.bf16.mxu0 0
        %741 = vmatpush1.bf16.msra.mxu0 0
        %742 = vmatprep.subr.bf16.mxu0 0
        %743 = vmatpush1.bf16.msra.mxu0 0
        %744 = vmatprep.subr.bf16.mxu0 0
        %745 = vmatpush1.bf16.msra.mxu0 0
        %746 = vmatprep.subr.bf16.mxu0 0
        %747 = vmatpush1.bf16.msra.mxu0 0
        %748 = vmatprep.subr.bf16.mxu0 0
        %749 = vmatpush1.bf16.msra.mxu0 0
        %750 = vmatprep.subr.bf16.mxu0 0
        %751 = vmatpush1.bf16.msra.mxu0 0
        %752 = vmatprep.subr.bf16.mxu0 0
        %753 = vmatpush1.bf16.msra.mxu0 0
        %754 = vmatprep.mubr.bf16.mxu0 0
        %755 = vmatmul.mubr.bf16.gmra.mrb[0].mxu0 %v716
        %v756 = vpop.f32.mrb[0].mxu0
        %v757 = vadd.f32 0.0, %v756
        %v758 = vpop.f32.mrb[0].mxu0
        %v759 = vpop.f32.mrb[0].mxu0
        %v760 = vpop.f32.mrb[0].mxu0
        %761 = vdwg.mxu0
        %v762 = vpack.c.bf16 %v757, %v757
        %764 = vrot.lane.b32.xlu0 %v652, 96
        %v765 = vpop.permute.xlu0 %764
        %767 = vrot.lane.b32.xlu0 %v653, 96
        %v768 = vpop.permute.xlu0 %767
        %v770 = vsel %vm655, %v765, 0
        %v773 = vsel %vm655, %v768, 0
        %775 = vmatprep.subr.bf16.mxu0 0
        %776 = vmatpush1.bf16.xpose.msra.mxu0 %v773
        %777 = vmatprep.subr.bf16.mxu0 0
        %778 = vmatpush1.bf16.xpose.msra.mxu0 0
        %779 = vmatprep.subr.bf16.mxu0 0
        %780 = vmatpush1.bf16.xpose.msra.mxu0 0
        %781 = vmatprep.subr.bf16.mxu0 0
        %782 = vmatpush1.bf16.xpose.msra.mxu0 0
        %783 = vmatprep.subr.bf16.mxu0 0
        %784 = vmatpush1.bf16.xpose.msra.mxu0 0
        %785 = vmatprep.subr.bf16.mxu0 0
        %786 = vmatpush1.bf16.xpose.msra.mxu0 0
        %787 = vmatprep.subr.bf16.mxu0 0
        %788 = vmatpush1.bf16.xpose.msra.mxu0 0
        %789 = vmatprep.subr.bf16.mxu0 0
        %790 = vmatpush1.bf16.xpose.msra.mxu0 0
        %791 = vmatprep.subr.bf16.mxu0 0
        %792 = vmatpush1.bf16.xpose.msra.mxu0 0
        %793 = vmatprep.subr.bf16.mxu0 0
        %794 = vmatpush1.bf16.xpose.msra.mxu0 0
        %795 = vmatprep.subr.bf16.mxu0 0
        %796 = vmatpush1.bf16.xpose.msra.mxu0 0
        %797 = vmatprep.subr.bf16.mxu0 0
        %798 = vmatpush1.bf16.xpose.msra.mxu0 0
        %799 = vmatprep.subr.bf16.mxu0 0
        %800 = vmatpush1.bf16.xpose.msra.mxu0 0
        %801 = vmatprep.subr.bf16.mxu0 0
        %802 = vmatpush1.bf16.xpose.msra.mxu0 0
        %803 = vmatprep.subr.bf16.mxu0 0
        %804 = vmatpush1.bf16.xpose.msra.mxu0 0
        %805 = vmatprep.subr.bf16.mxu0 0
        %806 = vmatpush1.bf16.xpose.msra.mxu0 0
        %807 = vmatprep.mubr.bf16.mxu0 0
        %808 = vmatmul.mubr.bf16.gmra.mrb[0].mxu0 %v770
        %v809 = vpop.f32.mrb[0].mxu0
        %v810 = vadd.f32 0.0, %v809
        %v811 = vpop.f32.mrb[0].mxu0
        %v812 = vpop.f32.mrb[0].mxu0
        %v813 = vpop.f32.mrb[0].mxu0
        %814 = vdwg.mxu0
        %v815 = vsel %vm702, %v810, -inf
        %816 = vmax.xlane.f32.xlu0 %v815
        %v817 = vpop.xlane.xlu0 %816
        %v818 = vsub.f32 %v810, %v817
        %v819 = vmul.f32 %v818, 1.442695
        %v820 = vpow.pop %v819
        %v821 = vsel %vm702, %v820, 0.0
        %822 = vadd.xlane.f32.xlu0 %v821
        %v823 = vpop.xlane.xlu0 %822
        %v824 = vrcp.pop %v823
        %v825 = vmul.f32 %v820, %v824
        %v826 = vpack.c.bf16 %v825, %v825
        %828 = vrot.lane.b32.xlu0 %v654, 96
        %v829 = vpop.permute.xlu0 %828
        %v831 = vsel %vm702, %v826, 0
        %v834 = vsel %vm718, %v829, 0
        %836 = vmatprep.subr.bf16.mxu0 0
        %837 = vmatpush1.bf16.msra.mxu0 %v834
        %838 = vmatprep.subr.bf16.mxu0 0
        %839 = vmatpush1.bf16.msra.mxu0 0
        %840 = vmatprep.subr.bf16.mxu0 0
        %841 = vmatpush1.bf16.msra.mxu0 0
        %842 = vmatprep.subr.bf16.mxu0 0
        %843 = vmatpush1.bf16.msra.mxu0 0
        %844 = vmatprep.subr.bf16.mxu0 0
        %845 = vmatpush1.bf16.msra.mxu0 0
        %846 = vmatprep.subr.bf16.mxu0 0
        %847 = vmatpush1.bf16.msra.mxu0 0
        %848 = vmatprep.subr.bf16.mxu0 0
        %849 = vmatpush1.bf16.msra.mxu0 0
        %850 = vmatprep.subr.bf16.mxu0 0
        %851 = vmatpush1.bf16.msra.mxu0 0
        %852 = vmatprep.subr.bf16.mxu0 0
        %853 = vmatpush1.bf16.msra.mxu0 0
        %854 = vmatprep.subr.bf16.mxu0 0
        %855 = vmatpush1.bf16.msra.mxu0 0
        %856 = vmatprep.subr.bf16.mxu0 0
        %857 = vmatpush1.bf16.msra.mxu0 0
        %858 = vmatprep.subr.bf16.mxu0 0
        %859 = vmatpush1.bf16.msra.mxu0 0
        %860 = vmatprep.subr.bf16.mxu0 0
        %861 = vmatpush1.bf16.msra.mxu0 0
        %862 = vmatprep.subr.bf16.mxu0 0
        %863 = vmatpush1.bf16.msra.mxu0 0
        %864 = vmatprep.subr.bf16.mxu0 0
        %865 = vmatpush1.bf16.msra.mxu0 0
        %866 = vmatprep.subr.bf16.mxu0 0
        %867 = vmatpush1.bf16.msra.mxu0 0
        %868 = vmatprep.mubr.bf16.mxu0 0
        %869 = vmatmul.mubr.bf16.gmra.mrb[0].mxu0 %v831
        %v870 = vpop.f32.mrb[0].mxu0
        %v871 = vadd.f32 0.0, %v870
        %v872 = vpop.f32.mrb[0].mxu0
        %v873 = vpop.f32.mrb[0].mxu0
        %v874 = vpop.f32.mrb[0].mxu0
        %875 = vdwg.mxu0
        %v876 = vpack.c.bf16 %v871, %v871
        %877 = vrot.lane.b32.xlu0 %v652, 64
        %v878 = vpop.permute.xlu0 %877
        %879 = vrot.lane.b32.xlu0 %v653, 64
        %v880 = vpop.permute.xlu0 %879
        %v882 = vsel %vm655, %v878, 0
        %v885 = vsel %vm655, %v880, 0
        %887 = vmatprep.subr.bf16.mxu0 0
        %888 = vmatpush1.bf16.xpose.msra.mxu0 %v885
        %889 = vmatprep.subr.bf16.mxu0 0
        %890 = vmatpush1.bf16.xpose.msra.mxu0 0
        %891 = vmatprep.subr.bf16.mxu0 0
        %892 = vmatpush1.bf16.xpose.msra.mxu0 0
        %893 = vmatprep.subr.bf16.mxu0 0
        %894 = vmatpush1.bf16.xpose.msra.mxu0 0
        %895 = vmatprep.subr.bf16.mxu0 0
        %896 = vmatpush1.bf16.xpose.msra.mxu0 0
        %897 = vmatprep.subr.bf16.mxu0 0
        %898 = vmatpush1.bf16.xpose.msra.mxu0 0
        %899 = vmatprep.subr.bf16.mxu0 0
        %900 = vmatpush1.bf16.xpose.msra.mxu0 0
        %901 = vmatprep.subr.bf16.mxu0 0
        %902 = vmatpush1.bf16.xpose.msra.mxu0 0
        %903 = vmatprep.subr.bf16.mxu0 0
        %904 = vmatpush1.bf16.xpose.msra.mxu0 0
        %905 = vmatprep.subr.bf16.mxu0 0
        %906 = vmatpush1.bf16.xpose.msra.mxu0 0
        %907 = vmatprep.subr.bf16.mxu0 0
        %908 = vmatpush1.bf16.xpose.msra.mxu0 0
        %909 = vmatprep.subr.bf16.mxu0 0
        %910 = vmatpush1.bf16.xpose.msra.mxu0 0
        %911 = vmatprep.subr.bf16.mxu0 0
        %912 = vmatpush1.bf16.xpose.msra.mxu0 0
        %913 = vmatprep.subr.bf16.mxu0 0
        %914 = vmatpush1.bf16.xpose.msra.mxu0 0
        %915 = vmatprep.subr.bf16.mxu0 0
        %916 = vmatpush1.bf16.xpose.msra.mxu0 0
        %917 = vmatprep.subr.bf16.mxu0 0
        %918 = vmatpush1.bf16.xpose.msra.mxu0 0
        %919 = vmatprep.mubr.bf16.mxu0 0
        %920 = vmatmul.mubr.bf16.gmra.mrb[0].mxu0 %v882
        %v921 = vpop.f32.mrb[0].mxu0
        %v922 = vadd.f32 0.0, %v921
        %v923 = vpop.f32.mrb[0].mxu0
        %v924 = vpop.f32.mrb[0].mxu0
        %v925 = vpop.f32.mrb[0].mxu0
        %926 = vdwg.mxu0
        %v927 = vsel %vm702, %v922, -inf
        %928 = vmax.xlane.f32.xlu0 %v927
        %v929 = vpop.xlane.xlu0 %928
        %v930 = vsub.f32 %v922, %v929
        %v931 = vmul.f32 %v930, 1.442695
        %v932 = vpow.pop %v931
        %v933 = vsel %vm702, %v932, 0.0
        %934 = vadd.xlane.f32.xlu0 %v933
        %v935 = vpop.xlane.xlu0 %934
        %v936 = vrcp.pop %v935
        %v937 = vmul.f32 %v932, %v936
        %v938 = vpack.c.bf16 %v937, %v937
        %939 = vrot.lane.b32.xlu0 %v654, 64
        %v940 = vpop.permute.xlu0 %939
        %v942 = vsel %vm702, %v938, 0
        %v945 = vsel %vm718, %v940, 0
        %947 = vmatprep.subr.bf16.mxu0 0
        %948 = vmatpush1.bf16.msra.mxu0 %v945
        %949 = vmatprep.subr.bf16.mxu0 0
        %950 = vmatpush1.bf16.msra.mxu0 0
        %951 = vmatprep.subr.bf16.mxu0 0
        %952 = vmatpush1.bf16.msra.mxu0 0
        %953 = vmatprep.subr.bf16.mxu0 0
        %954 = vmatpush1.bf16.msra.mxu0 0
        %955 = vmatprep.subr.bf16.mxu0 0
        %956 = vmatpush1.bf16.msra.mxu0 0
        %957 = vmatprep.subr.bf16.mxu0 0
        %958 = vmatpush1.bf16.msra.mxu0 0
        %959 = vmatprep.subr.bf16.mxu0 0
        %960 = vmatpush1.bf16.msra.mxu0 0
        %961 = vmatprep.subr.bf16.mxu0 0
        %962 = vmatpush1.bf16.msra.mxu0 0
        %963 = vmatprep.subr.bf16.mxu0 0
        %964 = vmatpush1.bf16.msra.mxu0 0
        %965 = vmatprep.subr.bf16.mxu0 0
        %966 = vmatpush1.bf16.msra.mxu0 0
        %967 = vmatprep.subr.bf16.mxu0 0
        %968 = vmatpush1.bf16.msra.mxu0 0
        %969 = vmatprep.subr.bf16.mxu0 0
        %970 = vmatpush1.bf16.msra.mxu0 0
        %971 = vmatprep.subr.bf16.mxu0 0
        %972 = vmatpush1.bf16.msra.mxu0 0
        %973 = vmatprep.subr.bf16.mxu0 0
        %974 = vmatpush1.bf16.msra.mxu0 0
        %975 = vmatprep.subr.bf16.mxu0 0
        %976 = vmatpush1.bf16.msra.mxu0 0
        %977 = vmatprep.subr.bf16.mxu0 0
        %978 = vmatpush1.bf16.msra.mxu0 0
        %979 = vmatprep.mubr.bf16.mxu0 0
        %980 = vmatmul.mubr.bf16.gmra.mrb[0].mxu0 %v942
        %v981 = vpop.f32.mrb[0].mxu0
        %v982 = vadd.f32 0.0, %v981
        %v983 = vpop.f32.mrb[0].mxu0
        %v984 = vpop.f32.mrb[0].mxu0
        %v985 = vpop.f32.mrb[0].mxu0
        %986 = vdwg.mxu0
        %v987 = vpack.c.bf16 %v982, %v982
        %988 = vrot.lane.b32.xlu0 %v652, 32
        %v989 = vpop.permute.xlu0 %988
        %990 = vrot.lane.b32.xlu0 %v653, 32
        %v991 = vpop.permute.xlu0 %990
        %v993 = vsel %vm655, %v989, 0
        %v996 = vsel %vm655, %v991, 0
        %998 = vmatprep.subr.bf16.mxu0 0
        %999 = vmatpush1.bf16.xpose.msra.mxu0 %v996
        %1000 = vmatprep.subr.bf16.mxu0 0
        %1001 = vmatpush1.bf16.xpose.msra.mxu0 0
        %1002 = vmatprep.subr.bf16.mxu0 0
        %1003 = vmatpush1.bf16.xpose.msra.mxu0 0
        %1004 = vmatprep.subr.bf16.mxu0 0
        %1005 = vmatpush1.bf16.xpose.msra.mxu0 0
        %1006 = vmatprep.subr.bf16.mxu0 0
        %1007 = vmatpush1.bf16.xpose.msra.mxu0 0
        %1008 = vmatprep.subr.bf16.mxu0 0
        %1009 = vmatpush1.bf16.xpose.msra.mxu0 0
        %1010 = vmatprep.subr.bf16.mxu0 0
        %1011 = vmatpush1.bf16.xpose.msra.mxu0 0
        %1012 = vmatprep.subr.bf16.mxu0 0
        %1013 = vmatpush1.bf16.xpose.msra.mxu0 0
        %1014 = vmatprep.subr.bf16.mxu0 0
        %1015 = vmatpush1.bf16.xpose.msra.mxu0 0
        %1016 = vmatprep.subr.bf16.mxu0 0
        %1017 = vmatpush1.bf16.xpose.msra.mxu0 0
        %1018 = vmatprep.subr.bf16.mxu0 0
        %1019 = vmatpush1.bf16.xpose.msra.mxu0 0
        %1020 = vmatprep.subr.bf16.mxu0 0
        %1021 = vmatpush1.bf16.xpose.msra.mxu0 0
        %1022 = vmatprep.subr.bf16.mxu0 0
        %1023 = vmatpush1.bf16.xpose.msra.mxu0 0
        %1024 = vmatprep.subr.bf16.mxu0 0
        %1025 = vmatpush1.bf16.xpose.msra.mxu0 0
        %1026 = vmatprep.subr.bf16.mxu0 0
        %1027 = vmatpush1.bf16.xpose.msra.mxu0 0
        %1028 = vmatprep.subr.bf16.mxu0 0
        %1029 = vmatpush1.bf16.xpose.msra.mxu0 0
        %1030 = vmatprep.mubr.bf16.mxu0 0
        %1031 = vmatmul.mubr.bf16.gmra.mrb[0].mxu0 %v993
        %v1032 = vpop.f32.mrb[0].mxu0
        %v1033 = vadd.f32 0.0, %v1032
        %v1034 = vpop.f32.mrb[0].mxu0
        %v1035 = vpop.f32.mrb[0].mxu0
        %v1036 = vpop.f32.mrb[0].mxu0
        %1037 = vdwg.mxu0
        %v1038 = vsel %vm702, %v1033, -inf
        %1039 = vmax.xlane.f32.xlu0 %v1038
        %v1040 = vpop.xlane.xlu0 %1039
        %v1041 = vsub.f32 %v1033, %v1040
        %v1042 = vmul.f32 %v1041, 1.442695
        %v1043 = vpow.pop %v1042
        %v1044 = vsel %vm702, %v1043, 0.0
        %1045 = vadd.xlane.f32.xlu0 %v1044
        %v1046 = vpop.xlane.xlu0 %1045
        %v1047 = vrcp.pop %v1046
        %v1048 = vmul.f32 %v1043, %v1047
        %v1049 = vpack.c.bf16 %v1048, %v1048
        %1050 = vrot.lane.b32.xlu0 %v654, 32
        %v1051 = vpop.permute.xlu0 %1050
        %v1053 = vsel %vm702, %v1049, 0
        %v1056 = vsel %vm718, %v1051, 0
        %1058 = vmatprep.subr.bf16.mxu0 0
        %1059 = vmatpush1.bf16.msra.mxu0 %v1056
        %1060 = vmatprep.subr.bf16.mxu0 0
        %1061 = vmatpush1.bf16.msra.mxu0 0
        %1062 = vmatprep.subr.bf16.mxu0 0
        %1063 = vmatpush1.bf16.msra.mxu0 0
        %1064 = vmatprep.subr.bf16.mxu0 0
        %1065 = vmatpush1.bf16.msra.mxu0 0
        %1066 = vmatprep.subr.bf16.mxu0 0
        %1067 = vmatpush1.bf16.msra.mxu0 0
        %1068 = vmatprep.subr.bf16.mxu0 0
        %1069 = vmatpush1.bf16.msra.mxu0 0
        %1070 = vmatprep.subr.bf16.mxu0 0
        %1071 = vmatpush1.bf16.msra.mxu0 0
        %1072 = vmatprep.subr.bf16.mxu0 0
        %1073 = vmatpush1.bf16.msra.mxu0 0
        %1074 = vmatprep.subr.bf16.mxu0 0
        %1075 = vmatpush1.bf16.msra.mxu0 0
        %1076 = vmatprep.subr.bf16.mxu0 0
        %1077 = vmatpush1.bf16.msra.mxu0 0
        %1078 = vmatprep.subr.bf16.mxu0 0
        %1079 = vmatpush1.bf16.msra.mxu0 0
        %1080 = vmatprep.subr.bf16.mxu0 0
        %1081 = vmatpush1.bf16.msra.mxu0 0
        %1082 = vmatprep.subr.bf16.mxu0 0
        %1083 = vmatpush1.bf16.msra.mxu0 0
        %1084 = vmatprep.subr.bf16.mxu0 0
        %1085 = vmatpush1.bf16.msra.mxu0 0
        %1086 = vmatprep.subr.bf16.mxu0 0
        %1087 = vmatpush1.bf16.msra.mxu0 0
        %1088 = vmatprep.subr.bf16.mxu0 0
        %1089 = vmatpush1.bf16.msra.mxu0 0
        %1090 = vmatprep.mubr.bf16.mxu0 0
        %1091 = vmatmul.mubr.bf16.gmra.mrb[0].mxu0 %v1053
        %v1092 = vpop.f32.mrb[0].mxu0
        %v1093 = vadd.f32 0.0, %v1092
        %v1094 = vpop.f32.mrb[0].mxu0
        %v1095 = vpop.f32.mrb[0].mxu0
        %v1096 = vpop.f32.mrb[0].mxu0
        %1097 = vdwg.mxu0
        %v1098 = vpack.c.bf16 %v1093, %v1093
        %1100 = vrot.lane.b32.xlu0 %v876, 32
        %v1101 = vpop.permute.xlu0 %1100
        %1103 = vrot.lane.b32.xlu0 %v987, 64
        %v1104 = vpop.permute.xlu0 %1103
        %1106 = vrot.lane.b32.xlu0 %v1098, 96
        %v1107 = vpop.permute.xlu0 %1106
        %v1110 = vsel %vm655, %v762, %v1101
        %vm1111 = vcmask 523264
        %v1113 = vsel %vm1111, %v1110, %v1104
        %vm1114 = vcmask 785408
        %v1116 = vsel %vm1114, %v1113, %v1107
        %v1117 = vrot.slane %v652, 4
        %v1118 = vrot.slane %v653, 4
        %v1120 = vsel %vm655, %v1117, 0
        %v1123 = vsel %vm655, %v1118, 0
        %1125 = vmatprep.subr.bf16.mxu0 0
        %1126 = vmatpush1.bf16.xpose.msra.mxu0 %v1123
        %1127 = vmatprep.subr.bf16.mxu0 0
        %1128 = vmatpush1.bf16.xpose.msra.mxu0 0
        %1129 = vmatprep.subr.bf16.mxu0 0
        %1130 = vmatpush1.bf16.xpose.msra.mxu0 0
        %1131 = vmatprep.subr.bf16.mxu0 0
        %1132 = vmatpush1.bf16.xpose.msra.mxu0 0
        %1133 = vmatprep.subr.bf16.mxu0 0
        %1134 = vmatpush1.bf16.xpose.msra.mxu0 0
        %1135 = vmatprep.subr.bf16.mxu0 0
        %1136 = vmatpush1.bf16.xpose.msra.mxu0 0
        %1137 = vmatprep.subr.bf16.mxu0 0
        %1138 = vmatpush1.bf16.xpose.msra.mxu0 0
        %1139 = vmatprep.subr.bf16.mxu0 0
        %1140 = vmatpush1.bf16.xpose.msra.mxu0 0
        %1141 = vmatprep.subr.bf16.mxu0 0
        %1142 = vmatpush1.bf16.xpose.msra.mxu0 0
        %1143 = vmatprep.subr.bf16.mxu0 0
        %1144 = vmatpush1.bf16.xpose.msra.mxu0 0
        %1145 = vmatprep.subr.bf16.mxu0 0
        %1146 = vmatpush1.bf16.xpose.msra.mxu0 0
        %1147 = vmatprep.subr.bf16.mxu0 0
        %1148 = vmatpush1.bf16.xpose.msra.mxu0 0
        %1149 = vmatprep.subr.bf16.mxu0 0
        %1150 = vmatpush1.bf16.xpose.msra.mxu0 0
        %1151 = vmatprep.subr.bf16.mxu0 0
        %1152 = vmatpush1.bf16.xpose.msra.mxu0 0
        %1153 = vmatprep.subr.bf16.mxu0 0
        %1154 = vmatpush1.bf16.xpose.msra.mxu0 0
        %1155 = vmatprep.subr.bf16.mxu0 0
        %1156 = vmatpush1.bf16.xpose.msra.mxu0 0
        %1157 = vmatprep.mubr.bf16.mxu0 0
        %1158 = vmatmul.mubr.bf16.gmra.mrb[0].mxu0 %v1120
        %v1159 = vpop.f32.mrb[0].mxu0
        %v1160 = vadd.f32 0.0, %v1159
        %v1161 = vpop.f32.mrb[0].mxu0
        %v1162 = vpop.f32.mrb[0].mxu0
        %v1163 = vpop.f32.mrb[0].mxu0
        %1164 = vdwg.mxu0
        %v1165 = vsel %vm702, %v1160, -inf
        %1166 = vmax.xlane.f32.xlu0 %v1165
        %v1167 = vpop.xlane.xlu0 %1166
        %v1168 = vsub.f32 %v1160, %v1167
        %v1169 = vmul.f32 %v1168, 1.442695
        %v1170 = vpow.pop %v1169
        %v1171 = vsel %vm702, %v1170, 0.0
        %1172 = vadd.xlane.f32.xlu0 %v1171
        %v1173 = vpop.xlane.xlu0 %1172
        %v1174 = vrcp.pop %v1173
        %v1175 = vmul.f32 %v1170, %v1174
        %v1176 = vpack.c.bf16 %v1175, %v1175
        %v1177 = vrot.slane %v654, 4
        %v1179 = vsel %vm702, %v1176, 0
        %v1182 = vsel %vm718, %v1177, 0
        %1184 = vmatprep.subr.bf16.mxu0 0
        %1185 = vmatpush1.bf16.msra.mxu0 %v1182
        %1186 = vmatprep.subr.bf16.mxu0 0
        %1187 = vmatpush1.bf16.msra.mxu0 0
        %1188 = vmatprep.subr.bf16.mxu0 0
        %1189 = vmatpush1.bf16.msra.mxu0 0
        %1190 = vmatprep.subr.bf16.mxu0 0
        %1191 = vmatpush1.bf16.msra.mxu0 0
        %1192 = vmatprep.subr.bf16.mxu0 0
        %1193 = vmatpush1.bf16.msra.mxu0 0
        %1194 = vmatprep.subr.bf16.mxu0 0
        %1195 = vmatpush1.bf16.msra.mxu0 0
        %1196 = vmatprep.subr.bf16.mxu0 0
        %1197 = vmatpush1.bf16.msra.mxu0 0
        %1198 = vmatprep.subr.bf16.mxu0 0
        %1199 = vmatpush1.bf16.msra.mxu0 0
        %1200 = vmatprep.subr.bf16.mxu0 0
        %1201 = vmatpush1.bf16.msra.mxu0 0
        %1202 = vmatprep.subr.bf16.mxu0 0
        %1203 = vmatpush1.bf16.msra.mxu0 0
        %1204 = vmatprep.subr.bf16.mxu0 0
        %1205 = vmatpush1.bf16.msra.mxu0 0
        %1206 = vmatprep.subr.bf16.mxu0 0
        %1207 = vmatpush1.bf16.msra.mxu0 0
        %1208 = vmatprep.subr.bf16.mxu0 0
        %1209 = vmatpush1.bf16.msra.mxu0 0
        %1210 = vmatprep.subr.bf16.mxu0 0
        %1211 = vmatpush1.bf16.msra.mxu0 0
        %1212 = vmatprep.subr.bf16.mxu0 0
        %1213 = vmatpush1.bf16.msra.mxu0 0
        %1214 = vmatprep.subr.bf16.mxu0 0
        %1215 = vmatpush1.bf16.msra.mxu0 0
        %1216 = vmatprep.mubr.bf16.mxu0 0
        %1217 = vmatmul.mubr.bf16.gmra.mrb[0].mxu0 %v1179
        %v1218 = vpop.f32.mrb[0].mxu0
        %v1219 = vadd.f32 0.0, %v1218
        %v1220 = vpop.f32.mrb[0].mxu0
        %v1221 = vpop.f32.mrb[0].mxu0
        %v1222 = vpop.f32.mrb[0].mxu0
        %1223 = vdwg.mxu0
        %v1224 = vpack.c.bf16 %v1219, %v1219
        %1225 = vrot.lane.b32.xlu0 %v1117, 96
        %v1226 = vpop.permute.xlu0 %1225
        %1227 = vrot.lane.b32.xlu0 %v1118, 96
        %v1228 = vpop.permute.xlu0 %1227
        %v1230 = vsel %vm655, %v1226, 0
        %v1233 = vsel %vm655, %v1228, 0
        %1235 = vmatprep.subr.bf16.mxu0 0
        %1236 = vmatpush1.bf16.xpose.msra.mxu0 %v1233
        %1237 = vmatprep.subr.bf16.mxu0 0
        %1238 = vmatpush1.bf16.xpose.msra.mxu0 0
        %1239 = vmatprep.subr.bf16.mxu0 0
        %1240 = vmatpush1.bf16.xpose.msra.mxu0 0
        %1241 = vmatprep.subr.bf16.mxu0 0
        %1242 = vmatpush1.bf16.xpose.msra.mxu0 0
        %1243 = vmatprep.subr.bf16.mxu0 0
        %1244 = vmatpush1.bf16.xpose.msra.mxu0 0
        %1245 = vmatprep.subr.bf16.mxu0 0
        %1246 = vmatpush1.bf16.xpose.msra.mxu0 0
        %1247 = vmatprep.subr.bf16.mxu0 0
        %1248 = vmatpush1.bf16.xpose.msra.mxu0 0
        %1249 = vmatprep.subr.bf16.mxu0 0
        %1250 = vmatpush1.bf16.xpose.msra.mxu0 0
        %1251 = vmatprep.subr.bf16.mxu0 0
        %1252 = vmatpush1.bf16.xpose.msra.mxu0 0
        %1253 = vmatprep.subr.bf16.mxu0 0
        %1254 = vmatpush1.bf16.xpose.msra.mxu0 0
        %1255 = vmatprep.subr.bf16.mxu0 0
        %1256 = vmatpush1.bf16.xpose.msra.mxu0 0
        %1257 = vmatprep.subr.bf16.mxu0 0
        %1258 = vmatpush1.bf16.xpose.msra.mxu0 0
        %1259 = vmatprep.subr.bf16.mxu0 0
        %1260 = vmatpush1.bf16.xpose.msra.mxu0 0
        %1261 = vmatprep.subr.bf16.mxu0 0
        %1262 = vmatpush1.bf16.xpose.msra.mxu0 0
        %1263 = vmatprep.subr.bf16.mxu0 0
        %1264 = vmatpush1.bf16.xpose.msra.mxu0 0
        %1265 = vmatprep.subr.bf16.mxu0 0
        %1266 = vmatpush1.bf16.xpose.msra.mxu0 0
        %1267 = vmatprep.mubr.bf16.mxu0 0
        %1268 = vmatmul.mubr.bf16.gmra.mrb[0].mxu0 %v1230
        %v1269 = vpop.f32.mrb[0].mxu0
        %v1270 = vadd.f32 0.0, %v1269
        %v1271 = vpop.f32.mrb[0].mxu0
        %v1272 = vpop.f32.mrb[0].mxu0
        %v1273 = vpop.f32.mrb[0].mxu0
        %1274 = vdwg.mxu0
        %v1275 = vsel %vm702, %v1270, -inf
        %1276 = vmax.xlane.f32.xlu0 %v1275
        %v1277 = vpop.xlane.xlu0 %1276
        %v1278 = vsub.f32 %v1270, %v1277
        %v1279 = vmul.f32 %v1278, 1.442695
        %v1280 = vpow.pop %v1279
        %v1281 = vsel %vm702, %v1280, 0.0
        %1282 = vadd.xlane.f32.xlu0 %v1281
        %v1283 = vpop.xlane.xlu0 %1282
        %v1284 = vrcp.pop %v1283
        %v1285 = vmul.f32 %v1280, %v1284
        %v1286 = vpack.c.bf16 %v1285, %v1285
        %1287 = vrot.lane.b32.xlu0 %v1177, 96
        %v1288 = vpop.permute.xlu0 %1287
        %v1290 = vsel %vm702, %v1286, 0
        %v1293 = vsel %vm718, %v1288, 0
        %1295 = vmatprep.subr.bf16.mxu0 0
        %1296 = vmatpush1.bf16.msra.mxu0 %v1293
        %1297 = vmatprep.subr.bf16.mxu0 0
        %1298 = vmatpush1.bf16.msra.mxu0 0
        %1299 = vmatprep.subr.bf16.mxu0 0
        %1300 = vmatpush1.bf16.msra.mxu0 0
        %1301 = vmatprep.subr.bf16.mxu0 0
        %1302 = vmatpush1.bf16.msra.mxu0 0
        %1303 = vmatprep.subr.bf16.mxu0 0
        %1304 = vmatpush1.bf16.msra.mxu0 0
        %1305 = vmatprep.subr.bf16.mxu0 0
        %1306 = vmatpush1.bf16.msra.mxu0 0
        %1307 = vmatprep.subr.bf16.mxu0 0
        %1308 = vmatpush1.bf16.msra.mxu0 0
        %1309 = vmatprep.subr.bf16.mxu0 0
        %1310 = vmatpush1.bf16.msra.mxu0 0
        %1311 = vmatprep.subr.bf16.mxu0 0
        %1312 = vmatpush1.bf16.msra.mxu0 0
        %1313 = vmatprep.subr.bf16.mxu0 0
        %1314 = vmatpush1.bf16.msra.mxu0 0
        %1315 = vmatprep.subr.bf16.mxu0 0
        %1316 = vmatpush1.bf16.msra.mxu0 0
        %1317 = vmatprep.subr.bf16.mxu0 0
        %1318 = vmatpush1.bf16.msra.mxu0 0
        %1319 = vmatprep.subr.bf16.mxu0 0
        %1320 = vmatpush1.bf16.msra.mxu0 0
        %1321 = vmatprep.subr.bf16.mxu0 0
        %1322 = vmatpush1.bf16.msra.mxu0 0
        %1323 = vmatprep.subr.bf16.mxu0 0
        %1324 = vmatpush1.bf16.msra.mxu0 0
        %1325 = vmatprep.subr.bf16.mxu0 0
        %1326 = vmatpush1.bf16.msra.mxu0 0
        %1327 = vmatprep.mubr.bf16.mxu0 0
        %1328 = vmatmul.mubr.bf16.gmra.mrb[0].mxu0 %v1290
        %v1329 = vpop.f32.mrb[0].mxu0
        %v1330 = vadd.f32 0.0, %v1329
        %v1331 = vpop.f32.mrb[0].mxu0
        %v1332 = vpop.f32.mrb[0].mxu0
        %v1333 = vpop.f32.mrb[0].mxu0
        %1334 = vdwg.mxu0
        %v1335 = vpack.c.bf16 %v1330, %v1330
        %1336 = vrot.lane.b32.xlu0 %v1117, 64
        %v1337 = vpop.permute.xlu0 %1336
        %1338 = vrot.lane.b32.xlu0 %v1118, 64
        %v1339 = vpop.permute.xlu0 %1338
        %v1341 = vsel %vm655, %v1337, 0
        %v1344 = vsel %vm655, %v1339, 0
        %1346 = vmatprep.subr.bf16.mxu0 0
        %1347 = vmatpush1.bf16.xpose.msra.mxu0 %v1344
        %1348 = vmatprep.subr.bf16.mxu0 0
        %1349 = vmatpush1.bf16.xpose.msra.mxu0 0
        %1350 = vmatprep.subr.bf16.mxu0 0
        %1351 = vmatpush1.bf16.xpose.msra.mxu0 0
        %1352 = vmatprep.subr.bf16.mxu0 0
        %1353 = vmatpush1.bf16.xpose.msra.mxu0 0
        %1354 = vmatprep.subr.bf16.mxu0 0
        %1355 = vmatpush1.bf16.xpose.msra.mxu0 0
        %1356 = vmatprep.subr.bf16.mxu0 0
        %1357 = vmatpush1.bf16.xpose.msra.mxu0 0
        %1358 = vmatprep.subr.bf16.mxu0 0
        %1359 = vmatpush1.bf16.xpose.msra.mxu0 0
        %1360 = vmatprep.subr.bf16.mxu0 0
        %1361 = vmatpush1.bf16.xpose.msra.mxu0 0
        %1362 = vmatprep.subr.bf16.mxu0 0
        %1363 = vmatpush1.bf16.xpose.msra.mxu0 0
        %1364 = vmatprep.subr.bf16.mxu0 0
        %1365 = vmatpush1.bf16.xpose.msra.mxu0 0
        %1366 = vmatprep.subr.bf16.mxu0 0
        %1367 = vmatpush1.bf16.xpose.msra.mxu0 0
        %1368 = vmatprep.subr.bf16.mxu0 0
        %1369 = vmatpush1.bf16.xpose.msra.mxu0 0
        %1370 = vmatprep.subr.bf16.mxu0 0
        %1371 = vmatpush1.bf16.xpose.msra.mxu0 0
        %1372 = vmatprep.subr.bf16.mxu0 0
        %1373 = vmatpush1.bf16.xpose.msra.mxu0 0
        %1374 = vmatprep.subr.bf16.mxu0 0
        %1375 = vmatpush1.bf16.xpose.msra.mxu0 0
        %1376 = vmatprep.subr.bf16.mxu0 0
        %1377 = vmatpush1.bf16.xpose.msra.mxu0 0
        %1378 = vmatprep.mubr.bf16.mxu0 0
        %1379 = vmatmul.mubr.bf16.gmra.mrb[0].mxu0 %v1341
        %v1380 = vpop.f32.mrb[0].mxu0
        %v1381 = vadd.f32 0.0, %v1380
        %v1382 = vpop.f32.mrb[0].mxu0
        %v1383 = vpop.f32.mrb[0].mxu0
        %v1384 = vpop.f32.mrb[0].mxu0
        %1385 = vdwg.mxu0
        %v1386 = vsel %vm702, %v1381, -inf
        %1387 = vmax.xlane.f32.xlu0 %v1386
        %v1388 = vpop.xlane.xlu0 %1387
        %v1389 = vsub.f32 %v1381, %v1388
        %v1390 = vmul.f32 %v1389, 1.442695
        %v1391 = vpow.pop %v1390
        %v1392 = vsel %vm702, %v1391, 0.0
        %1393 = vadd.xlane.f32.xlu0 %v1392
        %v1394 = vpop.xlane.xlu0 %1393
        %v1395 = vrcp.pop %v1394
        %v1396 = vmul.f32 %v1391, %v1395
        %v1397 = vpack.c.bf16 %v1396, %v1396
        %1398 = vrot.lane.b32.xlu0 %v1177, 64
        %v1399 = vpop.permute.xlu0 %1398
        %v1401 = vsel %vm702, %v1397, 0
        %v1404 = vsel %vm718, %v1399, 0
        %1406 = vmatprep.subr.bf16.mxu0 0
        %1407 = vmatpush1.bf16.msra.mxu0 %v1404
        %1408 = vmatprep.subr.bf16.mxu0 0
        %1409 = vmatpush1.bf16.msra.mxu0 0
        %1410 = vmatprep.subr.bf16.mxu0 0
        %1411 = vmatpush1.bf16.msra.mxu0 0
        %1412 = vmatprep.subr.bf16.mxu0 0
        %1413 = vmatpush1.bf16.msra.mxu0 0
        %1414 = vmatprep.subr.bf16.mxu0 0
        %1415 = vmatpush1.bf16.msra.mxu0 0
        %1416 = vmatprep.subr.bf16.mxu0 0
        %1417 = vmatpush1.bf16.msra.mxu0 0
        %1418 = vmatprep.subr.bf16.mxu0 0
        %1419 = vmatpush1.bf16.msra.mxu0 0
        %1420 = vmatprep.subr.bf16.mxu0 0
        %1421 = vmatpush1.bf16.msra.mxu0 0
        %1422 = vmatprep.subr.bf16.mxu0 0
        %1423 = vmatpush1.bf16.msra.mxu0 0
        %1424 = vmatprep.subr.bf16.mxu0 0
        %1425 = vmatpush1.bf16.msra.mxu0 0
        %1426 = vmatprep.subr.bf16.mxu0 0
        %1427 = vmatpush1.bf16.msra.mxu0 0
        %1428 = vmatprep.subr.bf16.mxu0 0
        %1429 = vmatpush1.bf16.msra.mxu0 0
        %1430 = vmatprep.subr.bf16.mxu0 0
        %1431 = vmatpush1.bf16.msra.mxu0 0
        %1432 = vmatprep.subr.bf16.mxu0 0
        %1433 = vmatpush1.bf16.msra.mxu0 0
        %1434 = vmatprep.subr.bf16.mxu0 0
        %1435 = vmatpush1.bf16.msra.mxu0 0
        %1436 = vmatprep.subr.bf16.mxu0 0
        %1437 = vmatpush1.bf16.msra.mxu0 0
        %1438 = vmatprep.mubr.bf16.mxu0 0
        %1439 = vmatmul.mubr.bf16.gmra.mrb[0].mxu0 %v1401
        %v1440 = vpop.f32.mrb[0].mxu0
        %v1441 = vadd.f32 0.0, %v1440
        %v1442 = vpop.f32.mrb[0].mxu0
        %v1443 = vpop.f32.mrb[0].mxu0
        %v1444 = vpop.f32.mrb[0].mxu0
        %1445 = vdwg.mxu0
        %v1446 = vpack.c.bf16 %v1441, %v1441
        %1447 = vrot.lane.b32.xlu0 %v1117, 32
        %v1448 = vpop.permute.xlu0 %1447
        %1449 = vrot.lane.b32.xlu0 %v1118, 32
        %v1450 = vpop.permute.xlu0 %1449
        %v1452 = vsel %vm655, %v1448, 0
        %v1455 = vsel %vm655, %v1450, 0
        %1457 = vmatprep.subr.bf16.mxu0 0
        %1458 = vmatpush1.bf16.xpose.msra.mxu0 %v1455
        %1459 = vmatprep.subr.bf16.mxu0 0
        %1460 = vmatpush1.bf16.xpose.msra.mxu0 0
        %1461 = vmatprep.subr.bf16.mxu0 0
        %1462 = vmatpush1.bf16.xpose.msra.mxu0 0
        %1463 = vmatprep.subr.bf16.mxu0 0
        %1464 = vmatpush1.bf16.xpose.msra.mxu0 0
        %1465 = vmatprep.subr.bf16.mxu0 0
        %1466 = vmatpush1.bf16.xpose.msra.mxu0 0
        %1467 = vmatprep.subr.bf16.mxu0 0
        %1468 = vmatpush1.bf16.xpose.msra.mxu0 0
        %1469 = vmatprep.subr.bf16.mxu0 0
        %1470 = vmatpush1.bf16.xpose.msra.mxu0 0
        %1471 = vmatprep.subr.bf16.mxu0 0
        %1472 = vmatpush1.bf16.xpose.msra.mxu0 0
        %1473 = vmatprep.subr.bf16.mxu0 0
        %1474 = vmatpush1.bf16.xpose.msra.mxu0 0
        %1475 = vmatprep.subr.bf16.mxu0 0
        %1476 = vmatpush1.bf16.xpose.msra.mxu0 0
        %1477 = vmatprep.subr.bf16.mxu0 0
        %1478 = vmatpush1.bf16.xpose.msra.mxu0 0
        %1479 = vmatprep.subr.bf16.mxu0 0
        %1480 = vmatpush1.bf16.xpose.msra.mxu0 0
        %1481 = vmatprep.subr.bf16.mxu0 0
        %1482 = vmatpush1.bf16.xpose.msra.mxu0 0
        %1483 = vmatprep.subr.bf16.mxu0 0
        %1484 = vmatpush1.bf16.xpose.msra.mxu0 0
        %1485 = vmatprep.subr.bf16.mxu0 0
        %1486 = vmatpush1.bf16.xpose.msra.mxu0 0
        %1487 = vmatprep.subr.bf16.mxu0 0
        %1488 = vmatpush1.bf16.xpose.msra.mxu0 0
        %1489 = vmatprep.mubr.bf16.mxu0 0
        %1490 = vmatmul.mubr.bf16.gmra.mrb[0].mxu0 %v1452
        %v1491 = vpop.f32.mrb[0].mxu0
        %v1492 = vadd.f32 0.0, %v1491
        %v1493 = vpop.f32.mrb[0].mxu0
        %v1494 = vpop.f32.mrb[0].mxu0
        %v1495 = vpop.f32.mrb[0].mxu0
        %1496 = vdwg.mxu0
        %v1497 = vsel %vm702, %v1492, -inf
        %1498 = vmax.xlane.f32.xlu0 %v1497
        %v1499 = vpop.xlane.xlu0 %1498
        %v1500 = vsub.f32 %v1492, %v1499
        %v1501 = vmul.f32 %v1500, 1.442695
        %v1502 = vpow.pop %v1501
        %v1503 = vsel %vm702, %v1502, 0.0
        %1504 = vadd.xlane.f32.xlu0 %v1503
        %v1505 = vpop.xlane.xlu0 %1504
        %v1506 = vrcp.pop %v1505
        %v1507 = vmul.f32 %v1502, %v1506
        %v1508 = vpack.c.bf16 %v1507, %v1507
        %1509 = vrot.lane.b32.xlu0 %v1177, 32
        %v1510 = vpop.permute.xlu0 %1509
        %v1512 = vsel %vm702, %v1508, 0
        %v1515 = vsel %vm718, %v1510, 0
        %1517 = vmatprep.subr.bf16.mxu0 0
        %1518 = vmatpush1.bf16.msra.mxu0 %v1515
        %1519 = vmatprep.subr.bf16.mxu0 0
        %1520 = vmatpush1.bf16.msra.mxu0 0
        %1521 = vmatprep.subr.bf16.mxu0 0
        %1522 = vmatpush1.bf16.msra.mxu0 0
        %1523 = vmatprep.subr.bf16.mxu0 0
        %1524 = vmatpush1.bf16.msra.mxu0 0
        %1525 = vmatprep.subr.bf16.mxu0 0
        %1526 = vmatpush1.bf16.msra.mxu0 0
        %1527 = vmatprep.subr.bf16.mxu0 0
        %1528 = vmatpush1.bf16.msra.mxu0 0
        %1529 = vmatprep.subr.bf16.mxu0 0
        %1530 = vmatpush1.bf16.msra.mxu0 0
        %1531 = vmatprep.subr.bf16.mxu0 0
        %1532 = vmatpush1.bf16.msra.mxu0 0
        %1533 = vmatprep.subr.bf16.mxu0 0
        %1534 = vmatpush1.bf16.msra.mxu0 0
        %1535 = vmatprep.subr.bf16.mxu0 0
        %1536 = vmatpush1.bf16.msra.mxu0 0
        %1537 = vmatprep.subr.bf16.mxu0 0
        %1538 = vmatpush1.bf16.msra.mxu0 0
        %1539 = vmatprep.subr.bf16.mxu0 0
        %1540 = vmatpush1.bf16.msra.mxu0 0
        %1541 = vmatprep.subr.bf16.mxu0 0
        %1542 = vmatpush1.bf16.msra.mxu0 0
        %1543 = vmatprep.subr.bf16.mxu0 0
        %1544 = vmatpush1.bf16.msra.mxu0 0
        %1545 = vmatprep.subr.bf16.mxu0 0
        %1546 = vmatpush1.bf16.msra.mxu0 0
        %1547 = vmatprep.subr.bf16.mxu0 0
        %1548 = vmatpush1.bf16.msra.mxu0 0
        %1549 = vmatprep.mubr.bf16.mxu0 0
        %1550 = vmatmul.mubr.bf16.gmra.mrb[0].mxu0 %v1512
        %v1551 = vpop.f32.mrb[0].mxu0
        %v1552 = vadd.f32 0.0, %v1551
        %v1553 = vpop.f32.mrb[0].mxu0
        %v1554 = vpop.f32.mrb[0].mxu0
        %v1555 = vpop.f32.mrb[0].mxu0
        %1556 = vdwg.mxu0
        %v1557 = vpack.c.bf16 %v1552, %v1552
        %1559 = vrot.lane.b32.xlu0 %v1335, 32
        %v1560 = vpop.permute.xlu0 %1559
        %1562 = vrot.lane.b32.xlu0 %v1446, 64
        %v1563 = vpop.permute.xlu0 %1562
        %1565 = vrot.lane.b32.xlu0 %v1557, 96
        %v1566 = vpop.permute.xlu0 %1565
        %v1569 = vsel %vm655, %v1224, %v1560
        %v1571 = vsel %vm1111, %v1569, %v1563
        %v1573 = vsel %vm1114, %v1571, %v1566
        %v1575 = vrot.slane %v1573, 4
        %v1577 = vsel %vm718, %v1116, %v1575
        %v1579 = vld [vmem:[#allocation7] sm:$0xf]
        %v1580 = vld [vmem:[#allocation7 + $0x4] sm:$0xf]
        %v1581 = vld [vmem:[#allocation7 + $0x8] sm:$0xf]
        %v1582 = vld [vmem:[#allocation7 + $0xc] sm:$0xf]
        %v1583 = vld [vmem:[#allocation7 + $0x10] sm:$0xf]
        %v1584 = vld [vmem:[#allocation7 + $0x14] sm:$0xf]
        %v1585 = vld [vmem:[#allocation7 + $0x18] sm:$0xf]
        %v1586 = vld [vmem:[#allocation7 + $0x1c] sm:$0xf]
        %v1587 = vld [vmem:[#allocation7 + $0x20] sm:$0xf]
        %v1588 = vld [vmem:[#allocation7 + $0x24] sm:$0xf]
        %v1589 = vld [vmem:[#allocation7 + $0x28] sm:$0xf]
        %v1590 = vld [vmem:[#allocation7 + $0x2c] sm:$0xf]
        %v1591 = vld [vmem:[#allocation7 + $0x30] sm:$0xf]
        %v1592 = vld [vmem:[#allocation7 + $0x34] sm:$0xf]
        %v1593 = vld [vmem:[#allocation7 + $0x38] sm:$0xf]
        %v1594 = vld [vmem:[#allocation7 + $0x3c] sm:$0xf]
        %v1595 = vlaneseq
        %v1596 = vshrl.u32 %v1595, 7
        %v1597 = vsub.s32 0, %v1596
        %v1598 = vrot.slane %v385, %v1597
        %v1615 = vunpack.c.l.b16 %v1579
        %v1616 = vunpack.c.l.b16 %v1580
        %v1617 = vunpack.c.l.b16 %v1581
        %v1618 = vunpack.c.l.b16 %v1582
        %v1619 = vunpack.c.l.b16 %v1583
        %v1620 = vunpack.c.l.b16 %v1584
        %v1621 = vunpack.c.l.b16 %v1585
        %v1622 = vunpack.c.l.b16 %v1586
        %v1623 = vunpack.c.l.b16 %v1587
        %v1624 = vunpack.c.l.b16 %v1588
        %v1625 = vunpack.c.l.b16 %v1589
        %v1626 = vunpack.c.l.b16 %v1590
        %v1627 = vunpack.c.l.b16 %v1591
        %v1628 = vunpack.c.l.b16 %v1592
        %v1629 = vunpack.c.l.b16 %v1593
        %v1630 = vunpack.c.l.b16 %v1594
        %v1631 = vpack.c.b16 %v1616, %v1615
        %v1632 = vpack.c.b16 %v1618, %v1617
        %v1633 = vpack.c.b16 %v1620, %v1619
        %v1634 = vpack.c.b16 %v1622, %v1621
        %v1635 = vpack.c.b16 %v1624, %v1623
        %v1636 = vpack.c.b16 %v1626, %v1625
        %v1637 = vpack.c.b16 %v1628, %v1627
        %v1638 = vpack.c.b16 %v1630, %v1629
        %1647 = vmatprep.subr.bf16.mxu0 0
        %1648 = vmatpush1.bf16.msra.mxu0 %v1631
        %1649 = vmatprep.subr.bf16.mxu0 0
        %1650 = vmatpush1.bf16.msra.mxu0 %v1632
        %1651 = vmatprep.subr.bf16.mxu0 0
        %1652 = vmatpush1.bf16.msra.mxu0 %v1633
        %1653 = vmatprep.subr.bf16.mxu0 0
        %1654 = vmatpush1.bf16.msra.mxu0 %v1634
        %1655 = vmatprep.subr.bf16.mxu0 0
        %1656 = vmatpush1.bf16.msra.mxu0 %v1635
        %1657 = vmatprep.subr.bf16.mxu0 0
        %1658 = vmatpush1.bf16.msra.mxu0 %v1636
        %1659 = vmatprep.subr.bf16.mxu0 0
        %1660 = vmatpush1.bf16.msra.mxu0 %v1637
        %1661 = vmatprep.subr.bf16.mxu0 0
        %1662 = vmatpush1.bf16.msra.mxu0 %v1638
        %1663 = vmatprep.subr.bf16.mxu0 0
        %1664 = vmatpush1.bf16.msra.mxu0 0
        %1665 = vmatprep.subr.bf16.mxu0 0
        %1666 = vmatpush1.bf16.msra.mxu0 0
        %1667 = vmatprep.subr.bf16.mxu0 0
        %1668 = vmatpush1.bf16.msra.mxu0 0
        %1669 = vmatprep.subr.bf16.mxu0 0
        %1670 = vmatpush1.bf16.msra.mxu0 0
        %1671 = vmatprep.subr.bf16.mxu0 0
        %1672 = vmatpush1.bf16.msra.mxu0 0
        %1673 = vmatprep.subr.bf16.mxu0 0
        %1674 = vmatpush1.bf16.msra.mxu0 0
        %1675 = vmatprep.subr.bf16.mxu0 0
        %1676 = vmatpush1.bf16.msra.mxu0 0
        %1677 = vmatprep.subr.bf16.mxu0 0
        %1678 = vmatpush1.bf16.msra.mxu0 0
        %1679 = vmatprep.mubr.bf16.mxu0 0
        %1680 = vmatmul.mubr.bf16.gmra.mrb[0].mxu0 %v1577
        %v1681 = vpop.f32.mrb[0].mxu0
        %v1682 = vadd.f32 %v1598, %v1681
        %v1683 = vpop.f32.mrb[0].mxu0
        %v1684 = vpop.f32.mrb[0].mxu0
        %v1685 = vadd.f32 %v1598, %v1684
        %v1686 = vpop.f32.mrb[0].mxu0
        %1687 = vdwg.mxu0
        %1688 = vadd.xlane.f32.xlu0 %v1682
        %v1689 = vpop.xlane.xlu0 %1688
        %1690 = vadd.xlane.f32.xlu0 %v1685
        %v1691 = vpop.xlane.xlu0 %1690
        %v1692 = vrcp.pop 128.0
        %v1693 = vmul.f32 %v1689, %v1692
        %v1694 = vmul.f32 %v1691, %v1692
        %v1695 = vsub.f32 %v1682, %v1693
        %v1696 = vsub.f32 %v1685, %v1694
        %v1697 = vmul.f32 %v1695, %v1695
        %v1698 = vmul.f32 %v1696, %v1696
        %1699 = vadd.xlane.f32.xlu0 %v1697
        %v1700 = vpop.xlane.xlu0 %1699
        %1701 = vadd.xlane.f32.xlu0 %v1698
        %v1702 = vpop.xlane.xlu0 %1701
        %v1703 = vmul.f32 %v1700, %v1692
        %v1704 = vmul.f32 %v1702, %v1692
        %v1705 = vadd.f32 %v1703, 1e-05
        %v1706 = vadd.f32 %v1704, 1e-05
        %v1707 = vrsqrt.pop %v1705
        %v1708 = vrsqrt.pop %v1706
        %v1709 = vmul.f32 %v1695, %v1707
        %v1710 = vmul.f32 %v1696, %v1708
        %v1711 = vlaneseq
        %v1712 = vshrl.u32 %v1711, 7
        %v1713 = vsub.s32 1, %v1712
        %v1714 = vrot.slane %v385, %v1713
        %v1715 = vmul.f32 %v1709, %v1714
        %v1716 = vmul.f32 %v1710, %v1714
        %v1717 = vlaneseq
        %v1718 = vshrl.u32 %v1717, 7
        %v1719 = vsub.s32 2, %v1718
        %v1720 = vrot.slane %v385, %v1719
        %v1721 = vadd.f32 %v1715, %v1720
        %v1722 = vadd.f32 %v1716, %v1720
        %v1723 = vadd.f32 %v386, %v1721
        %v1724 = vadd.f32 %v387, %v1722
        %v1725 = vpack.c.bf16 %v1724, %v1723
        %v1726 = vld [vmem:[#allocation8] sm:$0xff]
        %v1727 = vld [vmem:[#allocation8 + $0x8] sm:$0xff]
        %v1728 = vld [vmem:[#allocation8 + $0x10] sm:$0xff]
        %v1729 = vld [vmem:[#allocation8 + $0x18] sm:$0xff]
        %v1730 = vld [vmem:[#allocation8 + $0x20] sm:$0xff]
        %v1731 = vld [vmem:[#allocation8 + $0x28] sm:$0xff]
        %v1732 = vld [vmem:[#allocation8 + $0x30] sm:$0xff]
        %v1733 = vld [vmem:[#allocation8 + $0x38] sm:$0xff]
        %v1734 = vld [vmem:[#allocation8 + $0x40] sm:$0xff]
        %v1735 = vld [vmem:[#allocation8 + $0x48] sm:$0xff]
        %v1736 = vld [vmem:[#allocation8 + $0x50] sm:$0xff]
        %v1737 = vld [vmem:[#allocation8 + $0x58] sm:$0xff]
        %v1738 = vld [vmem:[#allocation8 + $0x60] sm:$0xff]
        %v1739 = vld [vmem:[#allocation8 + $0x68] sm:$0xff]
        %v1740 = vld [vmem:[#allocation8 + $0x70] sm:$0xff]
        %v1741 = vld [vmem:[#allocation8 + $0x78] sm:$0xff]
        %v1742 = vld [vmem:[%s6] sm:$0x3]
        %v1744 = vlaneseq
        %v1745 = vshrl.u32 %v1744, 7
        %v1746 = vsub.s32 0, %v1745
        %v1747 = vrot.slane %v1742, %v1746
        %v1748 = vlaneseq
        %v1749 = vshrl.u32 %v1748, 7
        %v1750 = vsub.s32 1, %v1749
        %v1751 = vrot.slane %v1742, %v1750
        %v1770 = vunpack.c.l.b16 %v1726
        %v1771 = vunpack.c.h.b16 %v1726
        %v1772 = vunpack.c.l.b16 %v1727
        %v1773 = vunpack.c.h.b16 %v1727
        %v1774 = vunpack.c.l.b16 %v1728
        %v1775 = vunpack.c.h.b16 %v1728
        %v1776 = vunpack.c.l.b16 %v1729
        %v1777 = vunpack.c.h.b16 %v1729
        %v1778 = vunpack.c.l.b16 %v1730
        %v1779 = vunpack.c.h.b16 %v1730
        %v1780 = vunpack.c.l.b16 %v1731
        %v1781 = vunpack.c.h.b16 %v1731
        %v1782 = vunpack.c.l.b16 %v1732
        %v1783 = vunpack.c.h.b16 %v1732
        %v1784 = vunpack.c.l.b16 %v1733
        %v1785 = vunpack.c.h.b16 %v1733
        %v1786 = vunpack.c.l.b16 %v1734
        %v1787 = vunpack.c.h.b16 %v1734
        %v1788 = vunpack.c.l.b16 %v1735
        %v1789 = vunpack.c.h.b16 %v1735
        %v1790 = vunpack.c.l.b16 %v1736
        %v1791 = vunpack.c.h.b16 %v1736
        %v1792 = vunpack.c.l.b16 %v1737
        %v1793 = vunpack.c.h.b16 %v1737
        %v1794 = vunpack.c.l.b16 %v1738
        %v1795 = vunpack.c.h.b16 %v1738
        %v1796 = vunpack.c.l.b16 %v1739
        %v1797 = vunpack.c.h.b16 %v1739
        %v1798 = vunpack.c.l.b16 %v1740
        %v1799 = vunpack.c.h.b16 %v1740
        %v1800 = vunpack.c.l.b16 %v1741
        %v1801 = vunpack.c.h.b16 %v1741
        %v1802 = vpack.c.b16 %v1772, %v1770
        %v1803 = vpack.c.b16 %v1773, %v1771
        %v1804 = vpack.c.b16 %v1776, %v1774
        %v1805 = vpack.c.b16 %v1777, %v1775
        %v1806 = vpack.c.b16 %v1780, %v1778
        %v1807 = vpack.c.b16 %v1781, %v1779
        %v1808 = vpack.c.b16 %v1784, %v1782
        %v1809 = vpack.c.b16 %v1785, %v1783
        %v1810 = vpack.c.b16 %v1788, %v1786
        %v1811 = vpack.c.b16 %v1789, %v1787
        %v1812 = vpack.c.b16 %v1792, %v1790
        %v1813 = vpack.c.b16 %v1793, %v1791
        %v1814 = vpack.c.b16 %v1796, %v1794
        %v1815 = vpack.c.b16 %v1797, %v1795
        %v1816 = vpack.c.b16 %v1800, %v1798
        %v1817 = vpack.c.b16 %v1801, %v1799
        %1834 = vmatprep.subr.bf16.mxu0 %v1803
        %1835 = vmatpush1.bf16.msra.mxu0 %v1802
        %1836 = vmatprep.subr.bf16.mxu0 %v1805
        %1837 = vmatpush1.bf16.msra.mxu0 %v1804
        %1838 = vmatprep.subr.bf16.mxu0 %v1807
        %1839 = vmatpush1.bf16.msra.mxu0 %v1806
        %1840 = vmatprep.subr.bf16.mxu0 %v1809
        %1841 = vmatpush1.bf16.msra.mxu0 %v1808
        %1842 = vmatprep.subr.bf16.mxu0 %v1811
        %1843 = vmatpush1.bf16.msra.mxu0 %v1810
        %1844 = vmatprep.subr.bf16.mxu0 %v1813
        %1845 = vmatpush1.bf16.msra.mxu0 %v1812
        %1846 = vmatprep.subr.bf16.mxu0 %v1815
        %1847 = vmatpush1.bf16.msra.mxu0 %v1814
        %1848 = vmatprep.subr.bf16.mxu0 %v1817
        %1849 = vmatpush1.bf16.msra.mxu0 %v1816
        %1850 = vmatprep.subr.bf16.mxu0 0
        %1851 = vmatpush1.bf16.msra.mxu0 0
        %1852 = vmatprep.subr.bf16.mxu0 0
        %1853 = vmatpush1.bf16.msra.mxu0 0
        %1854 = vmatprep.subr.bf16.mxu0 0
        %1855 = vmatpush1.bf16.msra.mxu0 0
        %1856 = vmatprep.subr.bf16.mxu0 0
        %1857 = vmatpush1.bf16.msra.mxu0 0
        %1858 = vmatprep.subr.bf16.mxu0 0
        %1859 = vmatpush1.bf16.msra.mxu0 0
        %1860 = vmatprep.subr.bf16.mxu0 0
        %1861 = vmatpush1.bf16.msra.mxu0 0
        %1862 = vmatprep.subr.bf16.mxu0 0
        %1863 = vmatpush1.bf16.msra.mxu0 0
        %1864 = vmatprep.subr.bf16.mxu0 0
        %1865 = vmatpush1.bf16.msra.mxu0 0
        %1866 = vmatprep.mubr.bf16.mxu0 0
        %1867 = vmatmul.mubr.bf16.gmra.mrb[0].mxu0 %v1725
        %v1868 = vpop.f32.mrb[0].mxu0
        %v1869 = vadd.f32 %v1747, %v1868
        %v1870 = vpop.f32.mrb[0].mxu0
        %v1871 = vadd.f32 %v1751, %v1870
        %v1872 = vpop.f32.mrb[0].mxu0
        %v1873 = vadd.f32 %v1747, %v1872
        %v1874 = vpop.f32.mrb[0].mxu0
        %v1875 = vadd.f32 %v1751, %v1874
        %1876 = vdwg.mxu0
        %v1877 = vmax.f32 %v1869, 0.0
        %v1878 = vmax.f32 %v1871, 0.0
        %v1879 = vmax.f32 %v1873, 0.0
        %v1880 = vmax.f32 %v1875, 0.0
        %v1881 = vpack.c.bf16 %v1879, %v1877
        %v1882 = vpack.c.bf16 %v1880, %v1878
        %v1883 = vld [vmem:[#allocation10] sm:$0xf]
        %v1884 = vld [vmem:[#allocation10 + $0x4] sm:$0xf]
        %v1885 = vld [vmem:[#allocation10 + $0x8] sm:$0xf]
        %v1886 = vld [vmem:[#allocation10 + $0xc] sm:$0xf]
        %v1887 = vld [vmem:[#allocation10 + $0x10] sm:$0xf]
        %v1888 = vld [vmem:[#allocation10 + $0x14] sm:$0xf]
        %v1889 = vld [vmem:[#allocation10 + $0x18] sm:$0xf]
        %v1890 = vld [vmem:[#allocation10 + $0x1c] sm:$0xf]
        %v1891 = vld [vmem:[#allocation10 + $0x20] sm:$0xf]
        %v1892 = vld [vmem:[#allocation10 + $0x24] sm:$0xf]
        %v1893 = vld [vmem:[#allocation10 + $0x28] sm:$0xf]
        %v1894 = vld [vmem:[#allocation10 + $0x2c] sm:$0xf]
        %v1895 = vld [vmem:[#allocation10 + $0x30] sm:$0xf]
        %v1896 = vld [vmem:[#allocation10 + $0x34] sm:$0xf]
        %v1897 = vld [vmem:[#allocation10 + $0x38] sm:$0xf]
        %v1898 = vld [vmem:[#allocation10 + $0x3c] sm:$0xf]
        %v1899 = vld [vmem:[#allocation10 + $0x40] sm:$0xf]
        %v1900 = vld [vmem:[#allocation10 + $0x44] sm:$0xf]
        %v1901 = vld [vmem:[#allocation10 + $0x48] sm:$0xf]
        %v1902 = vld [vmem:[#allocation10 + $0x4c] sm:$0xf]
        %v1903 = vld [vmem:[#allocation10 + $0x50] sm:$0xf]
        %v1904 = vld [vmem:[#allocation10 + $0x54] sm:$0xf]
        %v1905 = vld [vmem:[#allocation10 + $0x58] sm:$0xf]
        %v1906 = vld [vmem:[#allocation10 + $0x5c] sm:$0xf]
        %v1907 = vld [vmem:[#allocation10 + $0x60] sm:$0xf]
        %v1908 = vld [vmem:[#allocation10 + $0x64] sm:$0xf]
        %v1909 = vld [vmem:[#allocation10 + $0x68] sm:$0xf]
        %v1910 = vld [vmem:[#allocation10 + $0x6c] sm:$0xf]
        %v1911 = vld [vmem:[#allocation10 + $0x70] sm:$0xf]
        %v1912 = vld [vmem:[#allocation10 + $0x74] sm:$0xf]
        %v1913 = vld [vmem:[#allocation10 + $0x78] sm:$0xf]
        %v1914 = vld [vmem:[#allocation10 + $0x7c] sm:$0xf]
        %v1915 = vlaneseq
        %v1916 = vshrl.u32 %v1915, 7
        %v1917 = vsub.s32 3, %v1916
        %v1918 = vrot.slane %v385, %v1917
        %v1951 = vunpack.c.l.b16 %v1883
        %v1952 = vunpack.c.l.b16 %v1884
        %v1953 = vunpack.c.l.b16 %v1885
        %v1954 = vunpack.c.l.b16 %v1886
        %v1955 = vunpack.c.l.b16 %v1887
        %v1956 = vunpack.c.l.b16 %v1888
        %v1957 = vunpack.c.l.b16 %v1889
        %v1958 = vunpack.c.l.b16 %v1890
        %v1959 = vunpack.c.l.b16 %v1891
        %v1960 = vunpack.c.l.b16 %v1892
        %v1961 = vunpack.c.l.b16 %v1893
        %v1962 = vunpack.c.l.b16 %v1894
        %v1963 = vunpack.c.l.b16 %v1895
        %v1964 = vunpack.c.l.b16 %v1896
        %v1965 = vunpack.c.l.b16 %v1897
        %v1966 = vunpack.c.l.b16 %v1898
        %v1967 = vunpack.c.l.b16 %v1899
        %v1968 = vunpack.c.l.b16 %v1900
        %v1969 = vunpack.c.l.b16 %v1901
        %v1970 = vunpack.c.l.b16 %v1902
        %v1971 = vunpack.c.l.b16 %v1903
        %v1972 = vunpack.c.l.b16 %v1904
        %v1973 = vunpack.c.l.b16 %v1905
        %v1974 = vunpack.c.l.b16 %v1906
        %v1975 = vunpack.c.l.b16 %v1907
        %v1976 = vunpack.c.l.b16 %v1908
        %v1977 = vunpack.c.l.b16 %v1909
        %v1978 = vunpack.c.l.b16 %v1910
        %v1979 = vunpack.c.l.b16 %v1911
        %v1980 = vunpack.c.l.b16 %v1912
        %v1981 = vunpack.c.l.b16 %v1913
        %v1982 = vunpack.c.l.b16 %v1914
        %v1983 = vpack.c.b16 %v1952, %v1951
        %v1984 = vpack.c.b16 %v1954, %v1953
        %v1985 = vpack.c.b16 %v1956, %v1955
        %v1986 = vpack.c.b16 %v1958, %v1957
        %v1987 = vpack.c.b16 %v1960, %v1959
        %v1988 = vpack.c.b16 %v1962, %v1961
        %v1989 = vpack.c.b16 %v1964, %v1963
        %v1990 = vpack.c.b16 %v1966, %v1965
        %v1991 = vpack.c.b16 %v1968, %v1967
        %v1992 = vpack.c.b16 %v1970, %v1969
        %v1993 = vpack.c.b16 %v1972, %v1971
        %v1994 = vpack.c.b16 %v1974, %v1973
        %v1995 = vpack.c.b16 %v1976, %v1975
        %v1996 = vpack.c.b16 %v1978, %v1977
        %v1997 = vpack.c.b16 %v1980, %v1979
        %v1998 = vpack.c.b16 %v1982, %v1981
        %2015 = vmatprep.subr.bf16.mxu0 0
        %2016 = vmatpush1.bf16.msra.mxu0 %v1983
        %2017 = vmatprep.subr.bf16.mxu0 0
        %2018 = vmatpush1.bf16.msra.mxu0 %v1984
        %2019 = vmatprep.subr.bf16.mxu0 0
        %2020 = vmatpush1.bf16.msra.mxu0 %v1985
        %2021 = vmatprep.subr.bf16.mxu0 0
        %2022 = vmatpush1.bf16.msra.mxu0 %v1986
        %2023 = vmatprep.subr.bf16.mxu0 0
        %2024 = vmatpush1.bf16.msra.mxu0 %v1987
        %2025 = vmatprep.subr.bf16.mxu0 0
        %2026 = vmatpush1.bf16.msra.mxu0 %v1988
        %2027 = vmatprep.subr.bf16.mxu0 0
        %2028 = vmatpush1.bf16.msra.mxu0 %v1989
        %2029 = vmatprep.subr.bf16.mxu0 0
        %2030 = vmatpush1.bf16.msra.mxu0 %v1990
        %2031 = vmatprep.subr.bf16.mxu0 0
        %2032 = vmatpush1.bf16.msra.mxu0 %v1991
        %2033 = vmatprep.subr.bf16.mxu0 0
        %2034 = vmatpush1.bf16.msra.mxu0 %v1992
        %2035 = vmatprep.subr.bf16.mxu0 0
        %2036 = vmatpush1.bf16.msra.mxu0 %v1993
        %2037 = vmatprep.subr.bf16.mxu0 0
        %2038 = vmatpush1.bf16.msra.mxu0 %v1994
        %2039 = vmatprep.subr.bf16.mxu0 0
        %2040 = vmatpush1.bf16.msra.mxu0 %v1995
        %2041 = vmatprep.subr.bf16.mxu0 0
        %2042 = vmatpush1.bf16.msra.mxu0 %v1996
        %2043 = vmatprep.subr.bf16.mxu0 0
        %2044 = vmatpush1.bf16.msra.mxu0 %v1997
        %2045 = vmatprep.subr.bf16.mxu0 0
        %2046 = vmatpush1.bf16.msra.mxu0 %v1998
        %2047 = vmatprep.mubr.bf16.mxu0 %v1882
        %2048 = vmatmul.mubr.bf16.gmra.mrb[0].mxu0 %v1881
        %v2049 = vpop.f32.mrb[0].mxu0
        %v2050 = vadd.f32 %v1918, %v2049
        %v2051 = vpop.f32.mrb[0].mxu0
        %v2052 = vpop.f32.mrb[0].mxu0
        %v2053 = vadd.f32 %v1918, %v2052
        %v2054 = vpop.f32.mrb[0].mxu0
        %2055 = vdwg.mxu0
        %2056 = vadd.xlane.f32.xlu0 %v2050
        %v2057 = vpop.xlane.xlu0 %2056
        %2058 = vadd.xlane.f32.xlu0 %v2053
        %v2059 = vpop.xlane.xlu0 %2058
        %v2060 = vmul.f32 %v2057, %v1692
        %v2061 = vmul.f32 %v2059, %v1692
        %v2062 = vsub.f32 %v2050, %v2060
        %v2063 = vsub.f32 %v2053, %v2061
        %v2064 = vmul.f32 %v2062, %v2062
        %v2065 = vmul.f32 %v2063, %v2063
        %2066 = vadd.xlane.f32.xlu0 %v2064
        %v2067 = vpop.xlane.xlu0 %2066
        %2068 = vadd.xlane.f32.xlu0 %v2065
        %v2069 = vpop.xlane.xlu0 %2068
        %v2070 = vmul.f32 %v2067, %v1692
        %v2071 = vmul.f32 %v2069, %v1692
        %v2072 = vadd.f32 %v2070, 1e-05
        %v2073 = vadd.f32 %v2071, 1e-05
        %v2074 = vrsqrt.pop %v2072
        %v2075 = vrsqrt.pop %v2073
        %v2076 = vmul.f32 %v2062, %v2074
        %v2077 = vmul.f32 %v2063, %v2075
        %v2078 = vlaneseq
        %v2079 = vshrl.u32 %v2078, 7
        %v2080 = vsub.s32 4, %v2079
        %v2081 = vrot.slane %v385, %v2080
        %v2082 = vmul.f32 %v2076, %v2081
        %v2083 = vmul.f32 %v2077, %v2081
        %v2084 = vlaneseq
        %v2085 = vshrl.u32 %v2084, 7
        %v2086 = vsub.s32 5, %v2085
        %v2087 = vrot.slane %v385, %v2086
        %v2088 = vadd.f32 %v2082, %v2087
        %v2089 = vadd.f32 %v2083, %v2087
        %v2090 = vadd.f32 %v1723, %v2088
        %v2091 = vadd.f32 %v1724, %v2089
        %2092 = vst [vmem:[%s381] sm:$0xff] %v2090
        %2093 = vst [vmem:[%s381 + $0x8] sm:$0xff] %v2091
        %s2094 = sand.u32 %s208, 1
        %s2095 = scalar_lea.sflag [#allocation4], %s2094
        %s2096 = sand.u32 %s208, 1
        %s2097 = smul.addr %s2096, 16
        %s2098 = scalar_lea.vmem [#allocation11], %s2097
        // Predicated region
        $region73: #{tpu_custom_call.1} parent=51 // pred_check
          %p2099 = pneg %p218
        $region74: #{tpu_custom_call.1} parent=51 // pred_check_branch
          %2101 = sbr.rel (%p2099) target = $region76
        $region75: #{tpu_custom_call.1} parent=51 // pred_region
          %s2102 = smul.u32 2, %s27
          %s2104 = ssub.s32 256, 256
          %2105 = vsyncadd %s2095, %s2104
          %s2106 = smul.addr %s2102, 128
          %s2107 = scalar_lea.hbm %s8, %s2106
          %s2108 = sshll.u32 %s2098, 4
          %s2109 = int_to_ptr.vmem [resolvable:$true] %s2108
          %2114 = dma.vmem_to_hbm [thread:$0]  %s2109, 256, %s2107, %s2095, 128, 128, 8
        $region76: #{tpu_custom_call.1} parent=51 // pred_fallthru
          _
      $region52: #{tpu_custom_call.1} parent=5 // pred_fallthru
        _
      %p2115 = scmp.le.s32.totalorder 2, %s22
      // Predicated region
      $region77: #{tpu_custom_call.1} parent=5 // pred_check
        %p2116 = pneg %p2115
      $region78: #{tpu_custom_call.1} parent=5 // pred_check_branch
        %2118 = sbr.rel (%p2116) target = $region80
      $region79: #{tpu_custom_call.1} parent=5 // pred_region
        %s2119 = ssub.s32 %s22, 2
        // Predicated region
        $region81: #{tpu_custom_call.1} parent=79 // pred_check
          %p2120 = pneg %p224
        $region82: #{tpu_custom_call.1} parent=79 // pred_check_branch
          %2122 = sbr.rel (%p2120) target = $region84
        $region83: #{tpu_custom_call.1} parent=79 // pred_region
          %s2123 = sand.u32 %s209, 1
          %s2124 = scalar_lea.sflag [#allocation4], %s2123
          %s2125 = sand.u32 %s209, 1
          %s2126 = smul.addr %s2125, 16
          %s2127 = scalar_lea.vmem [#allocation11], %s2126
          %2128 = dma.done %s2124, 256
        $region84: #{tpu_custom_call.1} parent=79 // pred_fallthru
          _
      $region80: #{tpu_custom_call.1} parent=5 // pred_fallthru
        _
    $region6: #{tpu_custom_call.1} parent=1 // loop_footer
      %s26 = sadd.s32 1, %s22
    $region7: #{tpu_custom_call.1} parent=1 // loop_footer_branch
      %21 = sbr.rel target = $region3
    $region8: #{tpu_custom_call.1} parent=1 // loop_exit
      _
    %2129 = vsyncpa [#allocation3], 1
    %s2130 = scalar_lea.sflag [#allocation3], 1
    %2131 = vsyncpa %s2130, 1
    %2132 = vsyncpa [#allocation6], 1
    %2133 = vsyncpa [#allocation9], 1
    %2134 = vsyncpa [#allocation4], 1
    %s2135 = scalar_lea.sflag [#allocation4], 1
    %2136 = vsyncpa %s2135, 1

</llo_original>
